<compile_context>
chip_gen: v7x
topology: tpu7x:2x2x1
jax: 0.10.0
libtpu: 0.0.40
codegen_flags: <defaults>
</compile_context>

<pallas_src>
import jax
import jax.numpy as jnp
from jax import lax
from jax.experimental import pallas as pl
from jax.experimental.pallas import tpu as pltpu


# ----------------------------------------------------------------------------
# Fused per-entity pipeline (shared by both kernels).
# Refs (all 2-D, whole-array VMEM blocks):
#   a_f, a_s : (N, N)  normalized adjacencies (views f / s)
#   x        : (N, F)  node features
#   w1_f/b1_f/w2_f/b2_f, w1_s/b1_s/w2_s/b2_s : GCN weights (F,F) / biases (1,F)
#   fc1_w : (C, H)  fc1_b : (1, H)      (torch Linear weight transposed)
#   fc2_wt: (C, H)  fc2_b : (1, C)      (torch fc2 weight, row per channel)
#   cnn_w : (C*F, O) cnn_b : (1, O)     (Conv1d weight flattened / transposed)
# Returns: (N, O) float32
# ----------------------------------------------------------------------------
def _entity_pipeline(a_f_ref, a_s_ref, x_ref,
                     w1f_ref, b1f_ref, w2f_ref, b2f_ref,
                     w1s_ref, b1s_ref, w2s_ref, b2s_ref,
                     fc1w_ref, fc1b_ref, fc2wt_ref, fc2b_ref,
                     cw_ref, cb_ref):
    f32, bf16 = jnp.float32, jnp.bfloat16

    a_f = a_f_ref[...]
    a_s = a_s_ref[...]
    x = x_ref[...]
    n, feat = x.shape

    def dense_relu(h, w_ref, b_ref):
        # relu(h @ W + b), bf16 MXU operands, f32 accumulate / elementwise.
        hw = jnp.dot(h.astype(bf16), w_ref[...].astype(bf16),
                     preferred_element_type=f32)
        return jnp.maximum(hw + b_ref[...], 0.0)

    # ---- GCN layer 1: both views share X -> stack A's for one MXU pass -----
    a_stack = jnp.concatenate([a_f, a_s], axis=0).astype(bf16)        # (2N, N)
    ax = jnp.dot(a_stack, x.astype(bf16), preferred_element_type=f32)  # (2N, F)
    h_f1 = dense_relu(ax[:n, :], w1f_ref, b1f_ref)                     # (N, F)
    h_s1 = dense_relu(ax[n:, :], w1s_ref, b1s_ref)                     # (N, F)

    # ---- GCN layer 2 --------------------------------------------------------
    af16 = a_f.astype(bf16)
    as16 = a_s.astype(bf16)
    h_f2 = dense_relu(
        jnp.dot(af16, h_f1.astype(bf16), preferred_element_type=f32),
        w2f_ref, b2f_ref)                                              # (N, F)
    h_s2 = dense_relu(
        jnp.dot(as16, h_s1.astype(bf16), preferred_element_type=f32),
        w2s_ref, b2s_ref)                                              # (N, F)

    # channel order matches torch.cat((f1, f2, s1, s2), 1).t().view(1,C,F,N)
    chans = (h_f1, h_f2, h_s1, h_s2)

    # ---- channel attention: global avg-pool -> fc1 -> relu -> fc2 -> sigmoid
    # (pure XLU reductions + VPU broadcasts; no selector matmuls, no MXU)
    inv_nf = 1.0 / float(n * feat)
    means = [jnp.sum(jnp.sum(h, axis=1, keepdims=True), axis=0, keepdims=True)
             * inv_nf for h in chans]                                  # (1,1) each

    fc1w = fc1w_ref[...]                                               # (C, H)
    c = fc1w.shape[0]
    pre = fc1b_ref[...]                                                # (1, H)
    for ci in range(c):
        pre = pre + means[ci] * fc1w[ci:ci + 1, :]
    hid = jnp.maximum(pre, 0.0)                                        # (1, H)

    fc2wt = fc2wt_ref[...]                                             # (C, H)
    fc2b = fc2b_ref[...]                                               # (1, C)

    # per-channel attention scalar -> scale + relu; build lane-dense (N, C*F)
    scaled_parts = []
    for ci in range(c):
        a_ci = (jnp.sum(hid * fc2wt[ci:ci + 1, :], axis=1, keepdims=True)
                + fc2b[:, ci:ci + 1])                                  # (1,1)
        s_ci = jax.nn.sigmoid(a_ci)                                    # (1,1)
        scaled_parts.append(jnp.maximum(s_ci * chans[ci], 0.0))        # (N, F)
    scaled = jnp.concatenate(scaled_parts, axis=1)                     # (N, C*F)

    # ---- Conv1d(kernel=(F,1)) over the whole feature axis == one matmul ----
    out = jnp.dot(scaled.astype(bf16), cw_ref[...].astype(bf16),
                  preferred_element_type=f32) + cb_ref[...]            # (N, O)
    return out


def entity_kernel(*refs):
    # refs = 17 input refs + 1 output ref
    o_ref = refs[-1]
    o_ref[...] = _entity_pipeline(*refs[:-1])


def entity_final_kernel(*refs):
    # refs = x_on ref + 17 input refs + 1 output ref
    x_on_ref = refs[0]
    o_ref = refs[-1]
    y_on = _entity_pipeline(*refs[1:-1])                               # (N_d, O)
    # result = x_on @ y_on.T  (contract over out_channels), keep f32.
    o_ref[...] = lax.dot_general(
        x_on_ref[...], y_on, (((1,), (1,)), ((), ())),
        preferred_element_type=jnp.float32)


# ----------------------------------------------------------------------------
# pallas_call wrappers
# ----------------------------------------------------------------------------
def _full_specs(arrays):
    return [pl.BlockSpec(a.shape, lambda i: (0, 0)) for a in arrays]


def _entity_inputs(a_f, a_s, x, p):
    return (a_f, a_s, x,
            p["w1_f"], p["b1_f"], p["w2_f"], p["b2_f"],
            p["w1_s"], p["b1_s"], p["w2_s"], p["b2_s"],
            p["fc1_w"], p["fc1_b"], p["fc2_wt"], p["fc2_b"],
            p["cnn_w"], p["cnn_b"])


def run_entity(a_f, a_s, x, p):
    """Fused GCN towers + attention + conv for one entity -> (N, O)."""
    inputs = _entity_inputs(a_f, a_s, x, p)
    n = x.shape[0]
    oc = p["cnn_w"].shape[1]
    return pl.pallas_call(
        entity_kernel,
        out_shape=jax.ShapeDtypeStruct((n, oc), jnp.float32),
        grid=(1,),
        in_specs=_full_specs(inputs),
        out_specs=pl.BlockSpec((n, oc), lambda i: (0, 0)),
        compiler_params=pltpu.CompilerParams(
            dimension_semantics=("arbitrary",)),
    )(*inputs)


def run_entity_final(x_on, a_f, a_s, x, p):
    """Fused pipeline for the second entity + final x_on @ y_on.T."""
    inputs = (x_on,) + _entity_inputs(a_f, a_s, x, p)
    n_m = x_on.shape[0]
    n_d = x.shape[0]
    return pl.pallas_call(
        entity_final_kernel,
        out_shape=jax.ShapeDtypeStruct((n_m, n_d), jnp.float32),
        grid=(1,),
        in_specs=_full_specs(inputs),
        out_specs=pl.BlockSpec((n_m, n_d), lambda i: (0, 0)),
        compiler_params=pltpu.CompilerParams(
            dimension_semantics=("arbitrary",)),
    )(*inputs)


# ----------------------------------------------------------------------------
# Glue: GCN normalization, parameter init, full forward
# ----------------------------------------------------------------------------
def gcn_normalize(adj):
    """A_hat = D^-1/2 (A + I) D^-1/2  (dense, weighted)."""
    n = adj.shape[0]
    a_hat = adj + jnp.eye(n, dtype=adj.dtype)
    deg = jnp.sum(a_hat, axis=1)
    d_inv_sqrt = 1.0 / jnp.sqrt(deg)
    return d_inv_sqrt[:, None] * a_hat * d_inv_sqrt[None, :]


def make_entity_params(key, f, c, o):
    """Params for one entity (two GCN views, attention FCs, Conv1d)."""
    h = 5 * c
    ks = iter(jax.random.split(key, 16))

    def rn(shape, scale=0.1):
        return scale * jax.random.normal(next(ks), shape, dtype=jnp.float32)

    return {
        "w1_f": rn((f, f)), "b1_f": rn((1, f)),
        "w2_f": rn((f, f)), "b2_f": rn((1, f)),
        "w1_s": rn((f, f)), "b1_s": rn((1, f)),
        "w2_s": rn((f, f)), "b2_s": rn((1, f)),
        "fc1_w": rn((c, h)), "fc1_b": rn((1, h)),     # fc1: (1,C)@(C,H)+b
        "fc2_wt": rn((c, h)), "fc2_b": rn((1, c)),    # fc2 weight, row/channel
        "cnn_w": rn((c * f, o)), "cnn_b": rn((1, o)), # Conv1d flattened (CF,O)
    }


@jax.jit
def mmgcn_forward(params_m, params_d, x_m, x_d, a_mm_f, a_mm_s, a_dd_f, a_dd_s):
    # call 1: miRNA pipeline -> (N_m, O)
    x_on = run_entity(a_mm_f, a_mm_s, x_m, params_m)
    # call 2: disease pipeline + final score matmul -> (N_m, N_d)
    return run_entity_final(x_on, a_dd_f, a_dd_s, x_d, params_d)


if __name__ == "__main__":
    args = dict(fm=32, fd=32, miRNA_number=16, disease_number=24,
                view=2, gcn_layers=2, out_channels=8)
    c = args["view"] * args["gcn_layers"]          # channels = 4

    key = jax.random.PRNGKey(0)
    k_pm, k_pd, k_xm, k_xd, k_af, k_as, k_df, k_ds = jax.random.split(key, 8)

    params_m = make_entity_params(k_pm, args["fm"], c, args["out_channels"])
    params_d = make_entity_params(k_pd, args["fd"], c, args["out_channels"])

    # node features (torch.randn equivalents, deterministic here)
    x_m = jax.random.normal(k_xm, (args["miRNA_number"], args["fm"]),
                            dtype=jnp.float32)
    x_d = jax.random.normal(k_xd, (args["disease_number"], args["fd"]),
                            dtype=jnp.float32)

    # dense symmetric weighted similarity graphs -> normalized adjacency
    def rand_adj(k, n):
        a = jax.random.uniform(k, (n, n), dtype=jnp.float32)
        a = 0.5 * (a + a.T)
        a = a * (1.0 - jnp.eye(n, dtype=jnp.float32))
        return gcn_normalize(a)

    a_mm_f = rand_adj(k_af, args["miRNA_number"])
    a_mm_s = rand_adj(k_as, args["miRNA_number"])
    a_dd_f = rand_adj(k_df, args["disease_number"])
    a_dd_s = rand_adj(k_ds, args["disease_number"])

    out = mmgcn_forward(params_m, params_d, x_m, x_d,
                        a_mm_f, a_mm_s, a_dd_f, a_dd_s)
    out = jax.block_until_ready(out)

    assert out.shape == (args["miRNA_number"], args["disease_number"])
    assert out.dtype == jnp.float32
    assert bool(jnp.all(jnp.isfinite(out)))
    print("KERNEL_OK")
</pallas_src>

<mosaic_0001>
module attributes {stable_mosaic.version = 11 : i64} {
  func.func @entity_kernel(%arg0: i32, %arg1: memref<16x16xf32, #tpu.memory_space<vmem>>, %arg2: memref<16x16xf32, #tpu.memory_space<vmem>>, %arg3: memref<16x32xf32, #tpu.memory_space<vmem>>, %arg4: memref<32x32xf32, #tpu.memory_space<vmem>>, %arg5: memref<1x32xf32, #tpu.memory_space<vmem>>, %arg6: memref<32x32xf32, #tpu.memory_space<vmem>>, %arg7: memref<1x32xf32, #tpu.memory_space<vmem>>, %arg8: memref<32x32xf32, #tpu.memory_space<vmem>>, %arg9: memref<1x32xf32, #tpu.memory_space<vmem>>, %arg10: memref<32x32xf32, #tpu.memory_space<vmem>>, %arg11: memref<1x32xf32, #tpu.memory_space<vmem>>, %arg12: memref<4x20xf32, #tpu.memory_space<vmem>>, %arg13: memref<1x20xf32, #tpu.memory_space<vmem>>, %arg14: memref<4x20xf32, #tpu.memory_space<vmem>>, %arg15: memref<1x4xf32, #tpu.memory_space<vmem>>, %arg16: memref<128x8xf32, #tpu.memory_space<vmem>>, %arg17: memref<1x8xf32, #tpu.memory_space<vmem>>, %arg18: memref<16x8xf32, #tpu.memory_space<vmem>>) attributes {dimension_semantics = [#tpu.dimension_semantics<arbitrary>], iteration_bounds = array<i64: 1>, scalar_prefetch = 0 : i64, scratch_operands = 0 : i64, tpu.core_type = #tpu.core_type<tc>, window_params = [{pipeline_mode = #tpu.pipeline_mode<synchronous>, transform_indices = @transform_0, window_bounds = array<i64: 16, 16>}, {pipeline_mode = #tpu.pipeline_mode<synchronous>, transform_indices = @transform_1, window_bounds = array<i64: 16, 16>}, {pipeline_mode = #tpu.pipeline_mode<synchronous>, transform_indices = @transform_2, window_bounds = array<i64: 16, 32>}, {pipeline_mode = #tpu.pipeline_mode<synchronous>, transform_indices = @transform_3, window_bounds = array<i64: 32, 32>}, {pipeline_mode = #tpu.pipeline_mode<synchronous>, transform_indices = @transform_4, window_bounds = array<i64: 1, 32>}, {pipeline_mode = #tpu.pipeline_mode<synchronous>, transform_indices = @transform_5, window_bounds = array<i64: 32, 32>}, {pipeline_mode = #tpu.pipeline_mode<synchronous>, transform_indices = @transform_6, window_bounds = array<i64: 1, 32>}, {pipeline_mode = #tpu.pipeline_mode<synchronous>, transform_indices = @transform_7, window_bounds = array<i64: 32, 32>}, {pipeline_mode = #tpu.pipeline_mode<synchronous>, transform_indices = @transform_8, window_bounds = array<i64: 1, 32>}, {pipeline_mode = #tpu.pipeline_mode<synchronous>, transform_indices = @transform_9, window_bounds = array<i64: 32, 32>}, {pipeline_mode = #tpu.pipeline_mode<synchronous>, transform_indices = @transform_10, window_bounds = array<i64: 1, 32>}, {pipeline_mode = #tpu.pipeline_mode<synchronous>, transform_indices = @transform_11, window_bounds = array<i64: 4, 20>}, {pipeline_mode = #tpu.pipeline_mode<synchronous>, transform_indices = @transform_12, window_bounds = array<i64: 1, 20>}, {pipeline_mode = #tpu.pipeline_mode<synchronous>, transform_indices = @transform_13, window_bounds = array<i64: 4, 20>}, {pipeline_mode = #tpu.pipeline_mode<synchronous>, transform_indices = @transform_14, window_bounds = array<i64: 1, 4>}, {pipeline_mode = #tpu.pipeline_mode<synchronous>, transform_indices = @transform_15, window_bounds = array<i64: 128, 8>}, {pipeline_mode = #tpu.pipeline_mode<synchronous>, transform_indices = @transform_16, window_bounds = array<i64: 1, 8>}, {pipeline_mode = #tpu.pipeline_mode<synchronous>, transform_indices = @transform_17, window_bounds = array<i64: 16, 8>}]} {
    %c0 = arith.constant 0 : index
    %c0_0 = arith.constant 0 : index
    %0 = vector.load %arg1[%c0, %c0_0] : memref<16x16xf32, #tpu.memory_space<vmem>>, vector<16x16xf32>
    %c0_1 = arith.constant 0 : index
    %c0_2 = arith.constant 0 : index
    %1 = vector.load %arg2[%c0_1, %c0_2] : memref<16x16xf32, #tpu.memory_space<vmem>>, vector<16x16xf32>
    %c0_3 = arith.constant 0 : index
    %c0_4 = arith.constant 0 : index
    %2 = vector.load %arg3[%c0_3, %c0_4] : memref<16x32xf32, #tpu.memory_space<vmem>>, vector<16x32xf32>
    %3 = tpu.concatenate %0, %1 in 0 : vector<16x16xf32>, vector<16x16xf32> -> vector<32x16xf32>
    %4 = arith.truncf %3 : vector<32x16xf32> to vector<32x16xbf16>
    %5 = arith.truncf %2 : vector<16x32xf32> to vector<16x32xbf16>
    %cst = arith.constant dense<0.000000e+00> : vector<32x32xf32>
    %6 = tpu.matmul %4, %5, %cst {dimension_numbers = #tpu.dot_dimension_numbers<[1], [0], [0], [1], [0, 0, 1, 1], [], []>} : vector<32x16xbf16>, vector<16x32xbf16>, vector<32x32xf32> -> vector<32x32xf32>
    %7 = vector.extract_strided_slice %6 {offsets = [0, 0], sizes = [16, 32], strides = [1, 1]} : vector<32x32xf32> to vector<16x32xf32>
    %8 = arith.truncf %7 : vector<16x32xf32> to vector<16x32xbf16>
    %c0_5 = arith.constant 0 : index
    %c0_6 = arith.constant 0 : index
    %9 = vector.load %arg4[%c0_5, %c0_6] : memref<32x32xf32, #tpu.memory_space<vmem>>, vector<32x32xf32>
    %10 = arith.truncf %9 : vector<32x32xf32> to vector<32x32xbf16>
    %cst_7 = arith.constant dense<0.000000e+00> : vector<16x32xf32>
    %11 = tpu.matmul %8, %10, %cst_7 {dimension_numbers = #tpu.dot_dimension_numbers<[1], [0], [0], [1], [0, 0, 1, 1], [], []>} : vector<16x32xbf16>, vector<32x32xbf16>, vector<16x32xf32> -> vector<16x32xf32>
    %c0_8 = arith.constant 0 : index
    %c0_9 = arith.constant 0 : index
    %12 = vector.load %arg5[%c0_8, %c0_9] : memref<1x32xf32, #tpu.memory_space<vmem>>, vector<1x32xf32>
    %13 = vector.broadcast %12 : vector<1x32xf32> to vector<16x32xf32>
    %14 = arith.addf %11, %13 : vector<16x32xf32>
    %cst_10 = arith.constant 0.000000e+00 : f32
    %15 = vector.broadcast %cst_10 : f32 to vector<16x32xf32>
    %16 = arith.maximumf %14, %15 : vector<16x32xf32>
    %17 = vector.extract_strided_slice %6 {offsets = [16, 0], sizes = [16, 32], strides = [1, 1]} : vector<32x32xf32> to vector<16x32xf32>
    %18 = arith.truncf %17 : vector<16x32xf32> to vector<16x32xbf16>
    %c0_11 = arith.constant 0 : index
    %c0_12 = arith.constant 0 : index
    %19 = vector.load %arg8[%c0_11, %c0_12] : memref<32x32xf32, #tpu.memory_space<vmem>>, vector<32x32xf32>
    %20 = arith.truncf %19 : vector<32x32xf32> to vector<32x32xbf16>
    %cst_13 = arith.constant dense<0.000000e+00> : vector<16x32xf32>
    %21 = tpu.matmul %18, %20, %cst_13 {dimension_numbers = #tpu.dot_dimension_numbers<[1], [0], [0], [1], [0, 0, 1, 1], [], []>} : vector<16x32xbf16>, vector<32x32xbf16>, vector<16x32xf32> -> vector<16x32xf32>
    %c0_14 = arith.constant 0 : index
    %c0_15 = arith.constant 0 : index
    %22 = vector.load %arg9[%c0_14, %c0_15] : memref<1x32xf32, #tpu.memory_space<vmem>>, vector<1x32xf32>
    %23 = vector.broadcast %22 : vector<1x32xf32> to vector<16x32xf32>
    %24 = arith.addf %21, %23 : vector<16x32xf32>
    %cst_16 = arith.constant 0.000000e+00 : f32
    %25 = vector.broadcast %cst_16 : f32 to vector<16x32xf32>
    %26 = arith.maximumf %24, %25 : vector<16x32xf32>
    %27 = arith.truncf %0 : vector<16x16xf32> to vector<16x16xbf16>
    %28 = arith.truncf %1 : vector<16x16xf32> to vector<16x16xbf16>
    %29 = arith.truncf %16 : vector<16x32xf32> to vector<16x32xbf16>
    %cst_17 = arith.constant dense<0.000000e+00> : vector<16x32xf32>
    %30 = tpu.matmul %27, %29, %cst_17 {dimension_numbers = #tpu.dot_dimension_numbers<[1], [0], [0], [1], [0, 0, 1, 1], [], []>} : vector<16x16xbf16>, vector<16x32xbf16>, vector<16x32xf32> -> vector<16x32xf32>
    %31 = arith.truncf %30 : vector<16x32xf32> to vector<16x32xbf16>
    %c0_18 = arith.constant 0 : index
    %c0_19 = arith.constant 0 : index
    %32 = vector.load %arg6[%c0_18, %c0_19] : memref<32x32xf32, #tpu.memory_space<vmem>>, vector<32x32xf32>
    %33 = arith.truncf %32 : vector<32x32xf32> to vector<32x32xbf16>
    %cst_20 = arith.constant dense<0.000000e+00> : vector<16x32xf32>
    %34 = tpu.matmul %31, %33, %cst_20 {dimension_numbers = #tpu.dot_dimension_numbers<[1], [0], [0], [1], [0, 0, 1, 1], [], []>} : vector<16x32xbf16>, vector<32x32xbf16>, vector<16x32xf32> -> vector<16x32xf32>
    %c0_21 = arith.constant 0 : index
    %c0_22 = arith.constant 0 : index
    %35 = vector.load %arg7[%c0_21, %c0_22] : memref<1x32xf32, #tpu.memory_space<vmem>>, vector<1x32xf32>
    %36 = vector.broadcast %35 : vector<1x32xf32> to vector<16x32xf32>
    %37 = arith.addf %34, %36 : vector<16x32xf32>
    %cst_23 = arith.constant 0.000000e+00 : f32
    %38 = vector.broadcast %cst_23 : f32 to vector<16x32xf32>
    %39 = arith.maximumf %37, %38 : vector<16x32xf32>
    %40 = arith.truncf %26 : vector<16x32xf32> to vector<16x32xbf16>
    %cst_24 = arith.constant dense<0.000000e+00> : vector<16x32xf32>
    %41 = tpu.matmul %28, %40, %cst_24 {dimension_numbers = #tpu.dot_dimension_numbers<[1], [0], [0], [1], [0, 0, 1, 1], [], []>} : vector<16x16xbf16>, vector<16x32xbf16>, vector<16x32xf32> -> vector<16x32xf32>
    %42 = arith.truncf %41 : vector<16x32xf32> to vector<16x32xbf16>
    %c0_25 = arith.constant 0 : index
    %c0_26 = arith.constant 0 : index
    %43 = vector.load %arg10[%c0_25, %c0_26] : memref<32x32xf32, #tpu.memory_space<vmem>>, vector<32x32xf32>
    %44 = arith.truncf %43 : vector<32x32xf32> to vector<32x32xbf16>
    %cst_27 = arith.constant dense<0.000000e+00> : vector<16x32xf32>
    %45 = tpu.matmul %42, %44, %cst_27 {dimension_numbers = #tpu.dot_dimension_numbers<[1], [0], [0], [1], [0, 0, 1, 1], [], []>} : vector<16x32xbf16>, vector<32x32xbf16>, vector<16x32xf32> -> vector<16x32xf32>
    %c0_28 = arith.constant 0 : index
    %c0_29 = arith.constant 0 : index
    %46 = vector.load %arg11[%c0_28, %c0_29] : memref<1x32xf32, #tpu.memory_space<vmem>>, vector<1x32xf32>
    %47 = vector.broadcast %46 : vector<1x32xf32> to vector<16x32xf32>
    %48 = arith.addf %45, %47 : vector<16x32xf32>
    %cst_30 = arith.constant 0.000000e+00 : f32
    %49 = vector.broadcast %cst_30 : f32 to vector<16x32xf32>
    %50 = arith.maximumf %48, %49 : vector<16x32xf32>
    %cst_31 = arith.constant dense<0.000000e+00> : vector<16xf32>
    %51 = vector.multi_reduction <add>, %16, %cst_31 [1] : vector<16x32xf32> to vector<16xf32>
    %52 = vector.shape_cast %51 : vector<16xf32> to vector<16x1xf32>
    %cst_32 = arith.constant dense<0.000000e+00> : vector<1xf32>
    %53 = vector.multi_reduction <add>, %52, %cst_32 [0] : vector<16x1xf32> to vector<1xf32>
    %54 = vector.shape_cast %53 : vector<1xf32> to vector<1x1xf32>
    %cst_33 = arith.constant 0.001953125 : f32
    %55 = vector.broadcast %cst_33 : f32 to vector<1x1xf32>
    %56 = arith.mulf %54, %55 : vector<1x1xf32>
    %cst_34 = arith.constant dense<0.000000e+00> : vector<16xf32>
    %57 = vector.multi_reduction <add>, %39, %cst_34 [1] : vector<16x32xf32> to vector<16xf32>
    %58 = vector.shape_cast %57 : vector<16xf32> to vector<16x1xf32>
    %cst_35 = arith.constant dense<0.000000e+00> : vector<1xf32>
    %59 = vector.multi_reduction <add>, %58, %cst_35 [0] : vector<16x1xf32> to vector<1xf32>
    %60 = vector.shape_cast %59 : vector<1xf32> to vector<1x1xf32>
    %cst_36 = arith.constant 0.001953125 : f32
    %61 = vector.broadcast %cst_36 : f32 to vector<1x1xf32>
    %62 = arith.mulf %60, %61 : vector<1x1xf32>
    %cst_37 = arith.constant dense<0.000000e+00> : vector<16xf32>
    %63 = vector.multi_reduction <add>, %26, %cst_37 [1] : vector<16x32xf32> to vector<16xf32>
    %64 = vector.shape_cast %63 : vector<16xf32> to vector<16x1xf32>
    %cst_38 = arith.constant dense<0.000000e+00> : vector<1xf32>
    %65 = vector.multi_reduction <add>, %64, %cst_38 [0] : vector<16x1xf32> to vector<1xf32>
    %66 = vector.shape_cast %65 : vector<1xf32> to vector<1x1xf32>
    %cst_39 = arith.constant 0.001953125 : f32
    %67 = vector.broadcast %cst_39 : f32 to vector<1x1xf32>
    %68 = arith.mulf %66, %67 : vector<1x1xf32>
    %cst_40 = arith.constant dense<0.000000e+00> : vector<16xf32>
    %69 = vector.multi_reduction <add>, %50, %cst_40 [1] : vector<16x32xf32> to vector<16xf32>
    %70 = vector.shape_cast %69 : vector<16xf32> to vector<16x1xf32>
    %cst_41 = arith.constant dense<0.000000e+00> : vector<1xf32>
    %71 = vector.multi_reduction <add>, %70, %cst_41 [0] : vector<16x1xf32> to vector<1xf32>
    %72 = vector.shape_cast %71 : vector<1xf32> to vector<1x1xf32>
    %cst_42 = arith.constant 0.001953125 : f32
    %73 = vector.broadcast %cst_42 : f32 to vector<1x1xf32>
    %74 = arith.mulf %72, %73 : vector<1x1xf32>
    %c0_43 = arith.constant 0 : index
    %c0_44 = arith.constant 0 : index
    %75 = vector.load %arg12[%c0_43, %c0_44] : memref<4x20xf32, #tpu.memory_space<vmem>>, vector<4x20xf32>
    %c0_45 = arith.constant 0 : index
    %c0_46 = arith.constant 0 : index
    %76 = vector.load %arg13[%c0_45, %c0_46] : memref<1x20xf32, #tpu.memory_space<vmem>>, vector<1x20xf32>
    %77 = vector.extract_strided_slice %75 {offsets = [0, 0], sizes = [1, 20], strides = [1, 1]} : vector<4x20xf32> to vector<1x20xf32>
    %78 = vector.broadcast %56 : vector<1x1xf32> to vector<1x20xf32>
    %79 = arith.mulf %78, %77 : vector<1x20xf32>
    %80 = arith.addf %76, %79 : vector<1x20xf32>
    %81 = vector.extract_strided_slice %75 {offsets = [1, 0], sizes = [1, 20], strides = [1, 1]} : vector<4x20xf32> to vector<1x20xf32>
    %82 = vector.broadcast %62 : vector<1x1xf32> to vector<1x20xf32>
    %83 = arith.mulf %82, %81 : vector<1x20xf32>
    %84 = arith.addf %80, %83 : vector<1x20xf32>
    %85 = vector.extract_strided_slice %75 {offsets = [2, 0], sizes = [1, 20], strides = [1, 1]} : vector<4x20xf32> to vector<1x20xf32>
    %86 = vector.broadcast %68 : vector<1x1xf32> to vector<1x20xf32>
    %87 = arith.mulf %86, %85 : vector<1x20xf32>
    %88 = arith.addf %84, %87 : vector<1x20xf32>
    %89 = vector.extract_strided_slice %75 {offsets = [3, 0], sizes = [1, 20], strides = [1, 1]} : vector<4x20xf32> to vector<1x20xf32>
    %90 = vector.broadcast %74 : vector<1x1xf32> to vector<1x20xf32>
    %91 = arith.mulf %90, %89 : vector<1x20xf32>
    %92 = arith.addf %88, %91 : vector<1x20xf32>
    %cst_47 = arith.constant 0.000000e+00 : f32
    %93 = vector.broadcast %cst_47 : f32 to vector<1x20xf32>
    %94 = arith.maximumf %92, %93 : vector<1x20xf32>
    %c0_48 = arith.constant 0 : index
    %c0_49 = arith.constant 0 : index
    %95 = vector.load %arg14[%c0_48, %c0_49] : memref<4x20xf32, #tpu.memory_space<vmem>>, vector<4x20xf32>
    %c0_50 = arith.constant 0 : index
    %c0_51 = arith.constant 0 : index
    %96 = vector.load %arg15[%c0_50, %c0_51] : memref<1x4xf32, #tpu.memory_space<vmem>>, vector<1x4xf32>
    %97 = vector.extract_strided_slice %95 {offsets = [0, 0], sizes = [1, 20], strides = [1, 1]} : vector<4x20xf32> to vector<1x20xf32>
    %98 = arith.mulf %94, %97 : vector<1x20xf32>
    %cst_52 = arith.constant dense<0.000000e+00> : vector<1xf32>
    %99 = vector.multi_reduction <add>, %98, %cst_52 [1] : vector<1x20xf32> to vector<1xf32>
    %100 = vector.shape_cast %99 : vector<1xf32> to vector<1x1xf32>
    %101 = vector.extract_strided_slice %96 {offsets = [0, 0], sizes = [1, 1], strides = [1, 1]} : vector<1x4xf32> to vector<1x1xf32>
    %102 = arith.addf %100, %101 : vector<1x1xf32>
    %103 = arith.negf %102 : vector<1x1xf32>
    %104 = math.exp %103 : vector<1x1xf32>
    %cst_53 = arith.constant 1.000000e+00 : f32
    %105 = vector.broadcast %cst_53 : f32 to vector<1x1xf32>
    %106 = arith.addf %105, %104 : vector<1x1xf32>
    %107 = arith.divf %105, %106 : vector<1x1xf32>
    %108 = vector.broadcast %107 : vector<1x1xf32> to vector<16x32xf32>
    %109 = arith.mulf %108, %16 : vector<16x32xf32>
    %cst_54 = arith.constant 0.000000e+00 : f32
    %110 = vector.broadcast %cst_54 : f32 to vector<16x32xf32>
    %111 = arith.maximumf %109, %110 : vector<16x32xf32>
    %112 = vector.extract_strided_slice %95 {offsets = [1, 0], sizes = [1, 20], strides = [1, 1]} : vector<4x20xf32> to vector<1x20xf32>
    %113 = arith.mulf %94, %112 : vector<1x20xf32>
    %cst_55 = arith.constant dense<0.000000e+00> : vector<1xf32>
    %114 = vector.multi_reduction <add>, %113, %cst_55 [1] : vector<1x20xf32> to vector<1xf32>
    %115 = vector.shape_cast %114 : vector<1xf32> to vector<1x1xf32>
    %116 = vector.extract_strided_slice %96 {offsets = [0, 1], sizes = [1, 1], strides = [1, 1]} : vector<1x4xf32> to vector<1x1xf32>
    %117 = arith.addf %115, %116 : vector<1x1xf32>
    %118 = arith.negf %117 : vector<1x1xf32>
    %119 = math.exp %118 : vector<1x1xf32>
    %cst_56 = arith.constant 1.000000e+00 : f32
    %120 = vector.broadcast %cst_56 : f32 to vector<1x1xf32>
    %121 = arith.addf %120, %119 : vector<1x1xf32>
    %122 = arith.divf %120, %121 : vector<1x1xf32>
    %123 = vector.broadcast %122 : vector<1x1xf32> to vector<16x32xf32>
    %124 = arith.mulf %123, %39 : vector<16x32xf32>
    %cst_57 = arith.constant 0.000000e+00 : f32
    %125 = vector.broadcast %cst_57 : f32 to vector<16x32xf32>
    %126 = arith.maximumf %124, %125 : vector<16x32xf32>
    %127 = vector.extract_strided_slice %95 {offsets = [2, 0], sizes = [1, 20], strides = [1, 1]} : vector<4x20xf32> to vector<1x20xf32>
    %128 = arith.mulf %94, %127 : vector<1x20xf32>
    %cst_58 = arith.constant dense<0.000000e+00> : vector<1xf32>
    %129 = vector.multi_reduction <add>, %128, %cst_58 [1] : vector<1x20xf32> to vector<1xf32>
    %130 = vector.shape_cast %129 : vector<1xf32> to vector<1x1xf32>
    %131 = vector.extract_strided_slice %96 {offsets = [0, 2], sizes = [1, 1], strides = [1, 1]} : vector<1x4xf32> to vector<1x1xf32>
    %132 = arith.addf %130, %131 : vector<1x1xf32>
    %133 = arith.negf %132 : vector<1x1xf32>
    %134 = math.exp %133 : vector<1x1xf32>
    %cst_59 = arith.constant 1.000000e+00 : f32
    %135 = vector.broadcast %cst_59 : f32 to vector<1x1xf32>
    %136 = arith.addf %135, %134 : vector<1x1xf32>
    %137 = arith.divf %135, %136 : vector<1x1xf32>
    %138 = vector.broadcast %137 : vector<1x1xf32> to vector<16x32xf32>
    %139 = arith.mulf %138, %26 : vector<16x32xf32>
    %cst_60 = arith.constant 0.000000e+00 : f32
    %140 = vector.broadcast %cst_60 : f32 to vector<16x32xf32>
    %141 = arith.maximumf %139, %140 : vector<16x32xf32>
    %142 = vector.extract_strided_slice %95 {offsets = [3, 0], sizes = [1, 20], strides = [1, 1]} : vector<4x20xf32> to vector<1x20xf32>
    %143 = arith.mulf %94, %142 : vector<1x20xf32>
    %cst_61 = arith.constant dense<0.000000e+00> : vector<1xf32>
    %144 = vector.multi_reduction <add>, %143, %cst_61 [1] : vector<1x20xf32> to vector<1xf32>
    %145 = vector.shape_cast %144 : vector<1xf32> to vector<1x1xf32>
    %146 = vector.extract_strided_slice %96 {offsets = [0, 3], sizes = [1, 1], strides = [1, 1]} : vector<1x4xf32> to vector<1x1xf32>
    %147 = arith.addf %145, %146 : vector<1x1xf32>
    %148 = arith.negf %147 : vector<1x1xf32>
    %149 = math.exp %148 : vector<1x1xf32>
    %cst_62 = arith.constant 1.000000e+00 : f32
    %150 = vector.broadcast %cst_62 : f32 to vector<1x1xf32>
    %151 = arith.addf %150, %149 : vector<1x1xf32>
    %152 = arith.divf %150, %151 : vector<1x1xf32>
    %153 = vector.broadcast %152 : vector<1x1xf32> to vector<16x32xf32>
    %154 = arith.mulf %153, %50 : vector<16x32xf32>
    %cst_63 = arith.constant 0.000000e+00 : f32
    %155 = vector.broadcast %cst_63 : f32 to vector<16x32xf32>
    %156 = arith.maximumf %154, %155 : vector<16x32xf32>
    %157 = tpu.concatenate %111, %126, %141, %156 in 1 : vector<16x32xf32>, vector<16x32xf32>, vector<16x32xf32>, vector<16x32xf32> -> vector<16x128xf32>
    %158 = arith.truncf %157 : vector<16x128xf32> to vector<16x128xbf16>
    %c0_64 = arith.constant 0 : index
    %c0_65 = arith.constant 0 : index
    %159 = vector.load %arg16[%c0_64, %c0_65] : memref<128x8xf32, #tpu.memory_space<vmem>>, vector<128x8xf32>
    %160 = arith.truncf %159 : vector<128x8xf32> to vector<128x8xbf16>
    %cst_66 = arith.constant dense<0.000000e+00> : vector<16x8xf32>
    %161 = tpu.matmul %158, %160, %cst_66 {dimension_numbers = #tpu.dot_dimension_numbers<[1], [0], [0], [1], [0, 0, 1, 1], [], []>} : vector<16x128xbf16>, vector<128x8xbf16>, vector<16x8xf32> -> vector<16x8xf32>
    %c0_67 = arith.constant 0 : index
    %c0_68 = arith.constant 0 : index
    %162 = vector.load %arg17[%c0_67, %c0_68] : memref<1x8xf32, #tpu.memory_space<vmem>>, vector<1x8xf32>
    %163 = vector.broadcast %162 : vector<1x8xf32> to vector<16x8xf32>
    %164 = arith.addf %161, %163 : vector<16x8xf32>
    %c0_69 = arith.constant 0 : index
    %c0_70 = arith.constant 0 : index
    %165 = vector.load %arg18[%c0_69, %c0_70] : memref<16x8xf32, #tpu.memory_space<vmem>>, vector<16x8xf32>
    tpu.vector_store %arg18[%c0_69, %c0_70], %164 {strides = array<i32>} : memref<16x8xf32, #tpu.memory_space<vmem>>, vector<16x8xf32>,
    return
  }
  func.func @transform_0(%arg0: i32) -> (i32, i32) {
    %c0_i32 = arith.constant 0 : i32
    %c0_i32_0 = arith.constant 0 : i32
    %c0_i32_1 = arith.constant 0 : i32
    return %c0_i32, %c0_i32_0 : i32, i32
  }
  func.func @transform_1(%arg0: i32) -> (i32, i32) {
    %c0_i32 = arith.constant 0 : i32
    %c0_i32_0 = arith.constant 0 : i32
    %c0_i32_1 = arith.constant 0 : i32
    return %c0_i32, %c0_i32_0 : i32, i32
  }
  func.func @transform_2(%arg0: i32) -> (i32, i32) {
    %c0_i32 = arith.constant 0 : i32
    %c0_i32_0 = arith.constant 0 : i32
    %c0_i32_1 = arith.constant 0 : i32
    return %c0_i32, %c0_i32_0 : i32, i32
  }
  func.func @transform_3(%arg0: i32) -> (i32, i32) {
    %c0_i32 = arith.constant 0 : i32
    %c0_i32_0 = arith.constant 0 : i32
    %c0_i32_1 = arith.constant 0 : i32
    return %c0_i32, %c0_i32_0 : i32, i32
  }
  func.func @transform_4(%arg0: i32) -> (i32, i32) {
    %c0_i32 = arith.constant 0 : i32
    %c0_i32_0 = arith.constant 0 : i32
    %c0_i32_1 = arith.constant 0 : i32
    return %c0_i32, %c0_i32_0 : i32, i32
  }
  func.func @transform_5(%arg0: i32) -> (i32, i32) {
    %c0_i32 = arith.constant 0 : i32
    %c0_i32_0 = arith.constant 0 : i32
    %c0_i32_1 = arith.constant 0 : i32
    return %c0_i32, %c0_i32_0 : i32, i32
  }
  func.func @transform_6(%arg0: i32) -> (i32, i32) {
    %c0_i32 = arith.constant 0 : i32
    %c0_i32_0 = arith.constant 0 : i32
    %c0_i32_1 = arith.constant 0 : i32
    return %c0_i32, %c0_i32_0 : i32, i32
  }
  func.func @transform_7(%arg0: i32) -> (i32, i32) {
    %c0_i32 = arith.constant 0 : i32
    %c0_i32_0 = arith.constant 0 : i32
    %c0_i32_1 = arith.constant 0 : i32
    return %c0_i32, %c0_i32_0 : i32, i32
  }
  func.func @transform_8(%arg0: i32) -> (i32, i32) {
    %c0_i32 = arith.constant 0 : i32
    %c0_i32_0 = arith.constant 0 : i32
    %c0_i32_1 = arith.constant 0 : i32
    return %c0_i32, %c0_i32_0 : i32, i32
  }
  func.func @transform_9(%arg0: i32) -> (i32, i32) {
    %c0_i32 = arith.constant 0 : i32
    %c0_i32_0 = arith.constant 0 : i32
    %c0_i32_1 = arith.constant 0 : i32
    return %c0_i32, %c0_i32_0 : i32, i32
  }
  func.func @transform_10(%arg0: i32) -> (i32, i32) {
    %c0_i32 = arith.constant 0 : i32
    %c0_i32_0 = arith.constant 0 : i32
    %c0_i32_1 = arith.constant 0 : i32
    return %c0_i32, %c0_i32_0 : i32, i32
  }
  func.func @transform_11(%arg0: i32) -> (i32, i32) {
    %c0_i32 = arith.constant 0 : i32
    %c0_i32_0 = arith.constant 0 : i32
    %c0_i32_1 = arith.constant 0 : i32
    return %c0_i32, %c0_i32_0 : i32, i32
  }
  func.func @transform_12(%arg0: i32) -> (i32, i32) {
    %c0_i32 = arith.constant 0 : i32
    %c0_i32_0 = arith.constant 0 : i32
    %c0_i32_1 = arith.constant 0 : i32
    return %c0_i32, %c0_i32_0 : i32, i32
  }
  func.func @transform_13(%arg0: i32) -> (i32, i32) {
    %c0_i32 = arith.constant 0 : i32
    %c0_i32_0 = arith.constant 0 : i32
    %c0_i32_1 = arith.constant 0 : i32
    return %c0_i32, %c0_i32_0 : i32, i32
  }
  func.func @transform_14(%arg0: i32) -> (i32, i32) {
    %c0_i32 = arith.constant 0 : i32
    %c0_i32_0 = arith.constant 0 : i32
    %c0_i32_1 = arith.constant 0 : i32
    return %c0_i32, %c0_i32_0 : i32, i32
  }
  func.func @transform_15(%arg0: i32) -> (i32, i32) {
    %c0_i32 = arith.constant 0 : i32
    %c0_i32_0 = arith.constant 0 : i32
    %c0_i32_1 = arith.constant 0 : i32
    return %c0_i32, %c0_i32_0 : i32, i32
  }
  func.func @transform_16(%arg0: i32) -> (i32, i32) {
    %c0_i32 = arith.constant 0 : i32
    %c0_i32_0 = arith.constant 0 : i32
    %c0_i32_1 = arith.constant 0 : i32
    return %c0_i32, %c0_i32_0 : i32, i32
  }
  func.func @transform_17(%arg0: i32) -> (i32, i32) {
    %c0_i32 = arith.constant 0 : i32
    %c0_i32_0 = arith.constant 0 : i32
    %c0_i32_1 = arith.constant 0 : i32
    return %c0_i32, %c0_i32_0 : i32, i32
  }
}

module attributes {stable_mosaic.version = 11 : i64} {
  func.func @entity_final_kernel(%arg0: i32, %arg1: memref<16x8xf32, #tpu.memory_space<vmem>>, %arg2: memref<24x24xf32, #tpu.memory_space<vmem>>, %arg3: memref<24x24xf32, #tpu.memory_space<vmem>>, %arg4: memref<24x32xf32, #tpu.memory_space<vmem>>, %arg5: memref<32x32xf32, #tpu.memory_space<vmem>>, %arg6: memref<1x32xf32, #tpu.memory_space<vmem>>, %arg7: memref<32x32xf32, #tpu.memory_space<vmem>>, %arg8: memref<1x32xf32, #tpu.memory_space<vmem>>, %arg9: memref<32x32xf32, #tpu.memory_space<vmem>>, %arg10: memref<1x32xf32, #tpu.memory_space<vmem>>, %arg11: memref<32x32xf32, #tpu.memory_space<vmem>>, %arg12: memref<1x32xf32, #tpu.memory_space<vmem>>, %arg13: memref<4x20xf32, #tpu.memory_space<vmem>>, %arg14: memref<1x20xf32, #tpu.memory_space<vmem>>, %arg15: memref<4x20xf32, #tpu.memory_space<vmem>>, %arg16: memref<1x4xf32, #tpu.memory_space<vmem>>, %arg17: memref<128x8xf32, #tpu.memory_space<vmem>>, %arg18: memref<1x8xf32, #tpu.memory_space<vmem>>, %arg19: memref<16x24xf32, #tpu.memory_space<vmem>>) attributes {dimension_semantics = [#tpu.dimension_semantics<arbitrary>], iteration_bounds = array<i64: 1>, scalar_prefetch = 0 : i64, scratch_operands = 0 : i64, tpu.core_type = #tpu.core_type<tc>, window_params = [{pipeline_mode = #tpu.pipeline_mode<synchronous>, transform_indices = @transform_0, window_bounds = array<i64: 16, 8>}, {pipeline_mode = #tpu.pipeline_mode<synchronous>, transform_indices = @transform_1, window_bounds = array<i64: 24, 24>}, {pipeline_mode = #tpu.pipeline_mode<synchronous>, transform_indices = @transform_2, window_bounds = array<i64: 24, 24>}, {pipeline_mode = #tpu.pipeline_mode<synchronous>, transform_indices = @transform_3, window_bounds = array<i64: 24, 32>}, {pipeline_mode = #tpu.pipeline_mode<synchronous>, transform_indices = @transform_4, window_bounds = array<i64: 32, 32>}, {pipeline_mode = #tpu.pipeline_mode<synchronous>, transform_indices = @transform_5, window_bounds = array<i64: 1, 32>}, {pipeline_mode = #tpu.pipeline_mode<synchronous>, transform_indices = @transform_6, window_bounds = array<i64: 32, 32>}, {pipeline_mode = #tpu.pipeline_mode<synchronous>, transform_indices = @transform_7, window_bounds = array<i64: 1, 32>}, {pipeline_mode = #tpu.pipeline_mode<synchronous>, transform_indices = @transform_8, window_bounds = array<i64: 32, 32>}, {pipeline_mode = #tpu.pipeline_mode<synchronous>, transform_indices = @transform_9, window_bounds = array<i64: 1, 32>}, {pipeline_mode = #tpu.pipeline_mode<synchronous>, transform_indices = @transform_10, window_bounds = array<i64: 32, 32>}, {pipeline_mode = #tpu.pipeline_mode<synchronous>, transform_indices = @transform_11, window_bounds = array<i64: 1, 32>}, {pipeline_mode = #tpu.pipeline_mode<synchronous>, transform_indices = @transform_12, window_bounds = array<i64: 4, 20>}, {pipeline_mode = #tpu.pipeline_mode<synchronous>, transform_indices = @transform_13, window_bounds = array<i64: 1, 20>}, {pipeline_mode = #tpu.pipeline_mode<synchronous>, transform_indices = @transform_14, window_bounds = array<i64: 4, 20>}, {pipeline_mode = #tpu.pipeline_mode<synchronous>, transform_indices = @transform_15, window_bounds = array<i64: 1, 4>}, {pipeline_mode = #tpu.pipeline_mode<synchronous>, transform_indices = @transform_16, window_bounds = array<i64: 128, 8>}, {pipeline_mode = #tpu.pipeline_mode<synchronous>, transform_indices = @transform_17, window_bounds = array<i64: 1, 8>}, {pipeline_mode = #tpu.pipeline_mode<synchronous>, transform_indices = @transform_18, window_bounds = array<i64: 16, 24>}]} {
    %c0 = arith.constant 0 : index
    %c0_0 = arith.constant 0 : index
    %0 = vector.load %arg2[%c0, %c0_0] : memref<24x24xf32, #tpu.memory_space<vmem>>, vector<24x24xf32>
    %c0_1 = arith.constant 0 : index
    %c0_2 = arith.constant 0 : index
    %1 = vector.load %arg3[%c0_1, %c0_2] : memref<24x24xf32, #tpu.memory_space<vmem>>, vector<24x24xf32>
    %c0_3 = arith.constant 0 : index
    %c0_4 = arith.constant 0 : index
    %2 = vector.load %arg4[%c0_3, %c0_4] : memref<24x32xf32, #tpu.memory_space<vmem>>, vector<24x32xf32>
    %3 = tpu.concatenate %0, %1 in 0 : vector<24x24xf32>, vector<24x24xf32> -> vector<48x24xf32>
    %4 = arith.truncf %3 : vector<48x24xf32> to vector<48x24xbf16>
    %5 = arith.truncf %2 : vector<24x32xf32> to vector<24x32xbf16>
    %cst = arith.constant dense<0.000000e+00> : vector<48x32xf32>
    %6 = tpu.matmul %4, %5, %cst {dimension_numbers = #tpu.dot_dimension_numbers<[1], [0], [0], [1], [0, 0, 1, 1], [], []>} : vector<48x24xbf16>, vector<24x32xbf16>, vector<48x32xf32> -> vector<48x32xf32>
    %7 = vector.extract_strided_slice %6 {offsets = [0, 0], sizes = [24, 32], strides = [1, 1]} : vector<48x32xf32> to vector<24x32xf32>
    %8 = arith.truncf %7 : vector<24x32xf32> to vector<24x32xbf16>
    %c0_5 = arith.constant 0 : index
    %c0_6 = arith.constant 0 : index
    %9 = vector.load %arg5[%c0_5, %c0_6] : memref<32x32xf32, #tpu.memory_space<vmem>>, vector<32x32xf32>
    %10 = arith.truncf %9 : vector<32x32xf32> to vector<32x32xbf16>
    %cst_7 = arith.constant dense<0.000000e+00> : vector<24x32xf32>
    %11 = tpu.matmul %8, %10, %cst_7 {dimension_numbers = #tpu.dot_dimension_numbers<[1], [0], [0], [1], [0, 0, 1, 1], [], []>} : vector<24x32xbf16>, vector<32x32xbf16>, vector<24x32xf32> -> vector<24x32xf32>
    %c0_8 = arith.constant 0 : index
    %c0_9 = arith.constant 0 : index
    %12 = vector.load %arg6[%c0_8, %c0_9] : memref<1x32xf32, #tpu.memory_space<vmem>>, vector<1x32xf32>
    %13 = vector.broadcast %12 : vector<1x32xf32> to vector<24x32xf32>
    %14 = arith.addf %11, %13 : vector<24x32xf32>
    %cst_10 = arith.constant 0.000000e+00 : f32
    %15 = vector.broadcast %cst_10 : f32 to vector<24x32xf32>
    %16 = arith.maximumf %14, %15 : vector<24x32xf32>
    %17 = vector.extract_strided_slice %6 {offsets = [24, 0], sizes = [24, 32], strides = [1, 1]} : vector<48x32xf32> to vector<24x32xf32>
    %18 = arith.truncf %17 : vector<24x32xf32> to vector<24x32xbf16>
    %c0_11 = arith.constant 0 : index
    %c0_12 = arith.constant 0 : index
    %19 = vector.load %arg9[%c0_11, %c0_12] : memref<32x32xf32, #tpu.memory_space<vmem>>, vector<32x32xf32>
    %20 = arith.truncf %19 : vector<32x32xf32> to vector<32x32xbf16>
    %cst_13 = arith.constant dense<0.000000e+00> : vector<24x32xf32>
    %21 = tpu.matmul %18, %20, %cst_13 {dimension_numbers = #tpu.dot_dimension_numbers<[1], [0], [0], [1], [0, 0, 1, 1], [], []>} : vector<24x32xbf16>, vector<32x32xbf16>, vector<24x32xf32> -> vector<24x32xf32>
    %c0_14 = arith.constant 0 : index
    %c0_15 = arith.constant 0 : index
    %22 = vector.load %arg10[%c0_14, %c0_15] : memref<1x32xf32, #tpu.memory_space<vmem>>, vector<1x32xf32>
    %23 = vector.broadcast %22 : vector<1x32xf32> to vector<24x32xf32>
    %24 = arith.addf %21, %23 : vector<24x32xf32>
    %cst_16 = arith.constant 0.000000e+00 : f32
    %25 = vector.broadcast %cst_16 : f32 to vector<24x32xf32>
    %26 = arith.maximumf %24, %25 : vector<24x32xf32>
    %27 = arith.truncf %0 : vector<24x24xf32> to vector<24x24xbf16>
    %28 = arith.truncf %1 : vector<24x24xf32> to vector<24x24xbf16>
    %29 = arith.truncf %16 : vector<24x32xf32> to vector<24x32xbf16>
    %cst_17 = arith.constant dense<0.000000e+00> : vector<24x32xf32>
    %30 = tpu.matmul %27, %29, %cst_17 {dimension_numbers = #tpu.dot_dimension_numbers<[1], [0], [0], [1], [0, 0, 1, 1], [], []>} : vector<24x24xbf16>, vector<24x32xbf16>, vector<24x32xf32> -> vector<24x32xf32>
    %31 = arith.truncf %30 : vector<24x32xf32> to vector<24x32xbf16>
    %c0_18 = arith.constant 0 : index
    %c0_19 = arith.constant 0 : index
    %32 = vector.load %arg7[%c0_18, %c0_19] : memref<32x32xf32, #tpu.memory_space<vmem>>, vector<32x32xf32>
    %33 = arith.truncf %32 : vector<32x32xf32> to vector<32x32xbf16>
    %cst_20 = arith.constant dense<0.000000e+00> : vector<24x32xf32>
    %34 = tpu.matmul %31, %33, %cst_20 {dimension_numbers = #tpu.dot_dimension_numbers<[1], [0], [0], [1], [0, 0, 1, 1], [], []>} : vector<24x32xbf16>, vector<32x32xbf16>, vector<24x32xf32> -> vector<24x32xf32>
    %c0_21 = arith.constant 0 : index
    %c0_22 = arith.constant 0 : index
    %35 = vector.load %arg8[%c0_21, %c0_22] : memref<1x32xf32, #tpu.memory_space<vmem>>, vector<1x32xf32>
    %36 = vector.broadcast %35 : vector<1x32xf32> to vector<24x32xf32>
    %37 = arith.addf %34, %36 : vector<24x32xf32>
    %cst_23 = arith.constant 0.000000e+00 : f32
    %38 = vector.broadcast %cst_23 : f32 to vector<24x32xf32>
    %39 = arith.maximumf %37, %38 : vector<24x32xf32>
    %40 = arith.truncf %26 : vector<24x32xf32> to vector<24x32xbf16>
    %cst_24 = arith.constant dense<0.000000e+00> : vector<24x32xf32>
    %41 = tpu.matmul %28, %40, %cst_24 {dimension_numbers = #tpu.dot_dimension_numbers<[1], [0], [0], [1], [0, 0, 1, 1], [], []>} : vector<24x24xbf16>, vector<24x32xbf16>, vector<24x32xf32> -> vector<24x32xf32>
    %42 = arith.truncf %41 : vector<24x32xf32> to vector<24x32xbf16>
    %c0_25 = arith.constant 0 : index
    %c0_26 = arith.constant 0 : index
    %43 = vector.load %arg11[%c0_25, %c0_26] : memref<32x32xf32, #tpu.memory_space<vmem>>, vector<32x32xf32>
    %44 = arith.truncf %43 : vector<32x32xf32> to vector<32x32xbf16>
    %cst_27 = arith.constant dense<0.000000e+00> : vector<24x32xf32>
    %45 = tpu.matmul %42, %44, %cst_27 {dimension_numbers = #tpu.dot_dimension_numbers<[1], [0], [0], [1], [0, 0, 1, 1], [], []>} : vector<24x32xbf16>, vector<32x32xbf16>, vector<24x32xf32> -> vector<24x32xf32>
    %c0_28 = arith.constant 0 : index
    %c0_29 = arith.constant 0 : index
    %46 = vector.load %arg12[%c0_28, %c0_29] : memref<1x32xf32, #tpu.memory_space<vmem>>, vector<1x32xf32>
    %47 = vector.broadcast %46 : vector<1x32xf32> to vector<24x32xf32>
    %48 = arith.addf %45, %47 : vector<24x32xf32>
    %cst_30 = arith.constant 0.000000e+00 : f32
    %49 = vector.broadcast %cst_30 : f32 to vector<24x32xf32>
    %50 = arith.maximumf %48, %49 : vector<24x32xf32>
    %cst_31 = arith.constant dense<0.000000e+00> : vector<24xf32>
    %51 = vector.multi_reduction <add>, %16, %cst_31 [1] : vector<24x32xf32> to vector<24xf32>
    %52 = vector.shape_cast %51 : vector<24xf32> to vector<24x1xf32>
    %cst_32 = arith.constant dense<0.000000e+00> : vector<1xf32>
    %53 = vector.multi_reduction <add>, %52, %cst_32 [0] : vector<24x1xf32> to vector<1xf32>
    %54 = vector.shape_cast %53 : vector<1xf32> to vector<1x1xf32>
    %cst_33 = arith.constant 0.00130208337 : f32
    %55 = vector.broadcast %cst_33 : f32 to vector<1x1xf32>
    %56 = arith.mulf %54, %55 : vector<1x1xf32>
    %cst_34 = arith.constant dense<0.000000e+00> : vector<24xf32>
    %57 = vector.multi_reduction <add>, %39, %cst_34 [1] : vector<24x32xf32> to vector<24xf32>
    %58 = vector.shape_cast %57 : vector<24xf32> to vector<24x1xf32>
    %cst_35 = arith.constant dense<0.000000e+00> : vector<1xf32>
    %59 = vector.multi_reduction <add>, %58, %cst_35 [0] : vector<24x1xf32> to vector<1xf32>
    %60 = vector.shape_cast %59 : vector<1xf32> to vector<1x1xf32>
    %cst_36 = arith.constant 0.00130208337 : f32
    %61 = vector.broadcast %cst_36 : f32 to vector<1x1xf32>
    %62 = arith.mulf %60, %61 : vector<1x1xf32>
    %cst_37 = arith.constant dense<0.000000e+00> : vector<24xf32>
    %63 = vector.multi_reduction <add>, %26, %cst_37 [1] : vector<24x32xf32> to vector<24xf32>
    %64 = vector.shape_cast %63 : vector<24xf32> to vector<24x1xf32>
    %cst_38 = arith.constant dense<0.000000e+00> : vector<1xf32>
    %65 = vector.multi_reduction <add>, %64, %cst_38 [0] : vector<24x1xf32> to vector<1xf32>
    %66 = vector.shape_cast %65 : vector<1xf32> to vector<1x1xf32>
    %cst_39 = arith.constant 0.00130208337 : f32
    %67 = vector.broadcast %cst_39 : f32 to vector<1x1xf32>
    %68 = arith.mulf %66, %67 : vector<1x1xf32>
    %cst_40 = arith.constant dense<0.000000e+00> : vector<24xf32>
    %69 = vector.multi_reduction <add>, %50, %cst_40 [1] : vector<24x32xf32> to vector<24xf32>
    %70 = vector.shape_cast %69 : vector<24xf32> to vector<24x1xf32>
    %cst_41 = arith.constant dense<0.000000e+00> : vector<1xf32>
    %71 = vector.multi_reduction <add>, %70, %cst_41 [0] : vector<24x1xf32> to vector<1xf32>
    %72 = vector.shape_cast %71 : vector<1xf32> to vector<1x1xf32>
    %cst_42 = arith.constant 0.00130208337 : f32
    %73 = vector.broadcast %cst_42 : f32 to vector<1x1xf32>
    %74 = arith.mulf %72, %73 : vector<1x1xf32>
    %c0_43 = arith.constant 0 : index
    %c0_44 = arith.constant 0 : index
    %75 = vector.load %arg13[%c0_43, %c0_44] : memref<4x20xf32, #tpu.memory_space<vmem>>, vector<4x20xf32>
    %c0_45 = arith.constant 0 : index
    %c0_46 = arith.constant 0 : index
    %76 = vector.load %arg14[%c0_45, %c0_46] : memref<1x20xf32, #tpu.memory_space<vmem>>, vector<1x20xf32>
    %77 = vector.extract_strided_slice %75 {offsets = [0, 0], sizes = [1, 20], strides = [1, 1]} : vector<4x20xf32> to vector<1x20xf32>
    %78 = vector.broadcast %56 : vector<1x1xf32> to vector<1x20xf32>
    %79 = arith.mulf %78, %77 : vector<1x20xf32>
    %80 = arith.addf %76, %79 : vector<1x20xf32>
    %81 = vector.extract_strided_slice %75 {offsets = [1, 0], sizes = [1, 20], strides = [1, 1]} : vector<4x20xf32> to vector<1x20xf32>
    %82 = vector.broadcast %62 : vector<1x1xf32> to vector<1x20xf32>
    %83 = arith.mulf %82, %81 : vector<1x20xf32>
    %84 = arith.addf %80, %83 : vector<1x20xf32>
    %85 = vector.extract_strided_slice %75 {offsets = [2, 0], sizes = [1, 20], strides = [1, 1]} : vector<4x20xf32> to vector<1x20xf32>
    %86 = vector.broadcast %68 : vector<1x1xf32> to vector<1x20xf32>
    %87 = arith.mulf %86, %85 : vector<1x20xf32>
    %88 = arith.addf %84, %87 : vector<1x20xf32>
    %89 = vector.extract_strided_slice %75 {offsets = [3, 0], sizes = [1, 20], strides = [1, 1]} : vector<4x20xf32> to vector<1x20xf32>
    %90 = vector.broadcast %74 : vector<1x1xf32> to vector<1x20xf32>
    %91 = arith.mulf %90, %89 : vector<1x20xf32>
    %92 = arith.addf %88, %91 : vector<1x20xf32>
    %cst_47 = arith.constant 0.000000e+00 : f32
    %93 = vector.broadcast %cst_47 : f32 to vector<1x20xf32>
    %94 = arith.maximumf %92, %93 : vector<1x20xf32>
    %c0_48 = arith.constant 0 : index
    %c0_49 = arith.constant 0 : index
    %95 = vector.load %arg15[%c0_48, %c0_49] : memref<4x20xf32, #tpu.memory_space<vmem>>, vector<4x20xf32>
    %c0_50 = arith.constant 0 : index
    %c0_51 = arith.constant 0 : index
    %96 = vector.load %arg16[%c0_50, %c0_51] : memref<1x4xf32, #tpu.memory_space<vmem>>, vector<1x4xf32>
    %97 = vector.extract_strided_slice %95 {offsets = [0, 0], sizes = [1, 20], strides = [1, 1]} : vector<4x20xf32> to vector<1x20xf32>
    %98 = arith.mulf %94, %97 : vector<1x20xf32>
    %cst_52 = arith.constant dense<0.000000e+00> : vector<1xf32>
    %99 = vector.multi_reduction <add>, %98, %cst_52 [1] : vector<1x20xf32> to vector<1xf32>
    %100 = vector.shape_cast %99 : vector<1xf32> to vector<1x1xf32>
    %101 = vector.extract_strided_slice %96 {offsets = [0, 0], sizes = [1, 1], strides = [1, 1]} : vector<1x4xf32> to vector<1x1xf32>
    %102 = arith.addf %100, %101 : vector<1x1xf32>
    %103 = arith.negf %102 : vector<1x1xf32>
    %104 = math.exp %103 : vector<1x1xf32>
    %cst_53 = arith.constant 1.000000e+00 : f32
    %105 = vector.broadcast %cst_53 : f32 to vector<1x1xf32>
    %106 = arith.addf %105, %104 : vector<1x1xf32>
    %107 = arith.divf %105, %106 : vector<1x1xf32>
    %108 = vector.broadcast %107 : vector<1x1xf32> to vector<24x32xf32>
    %109 = arith.mulf %108, %16 : vector<24x32xf32>
    %cst_54 = arith.constant 0.000000e+00 : f32
    %110 = vector.broadcast %cst_54 : f32 to vector<24x32xf32>
    %111 = arith.maximumf %109, %110 : vector<24x32xf32>
    %112 = vector.extract_strided_slice %95 {offsets = [1, 0], sizes = [1, 20], strides = [1, 1]} : vector<4x20xf32> to vector<1x20xf32>
    %113 = arith.mulf %94, %112 : vector<1x20xf32>
    %cst_55 = arith.constant dense<0.000000e+00> : vector<1xf32>
    %114 = vector.multi_reduction <add>, %113, %cst_55 [1] : vector<1x20xf32> to vector<1xf32>
    %115 = vector.shape_cast %114 : vector<1xf32> to vector<1x1xf32>
    %116 = vector.extract_strided_slice %96 {offsets = [0, 1], sizes = [1, 1], strides = [1, 1]} : vector<1x4xf32> to vector<1x1xf32>
    %117 = arith.addf %115, %116 : vector<1x1xf32>
    %118 = arith.negf %117 : vector<1x1xf32>
    %119 = math.exp %118 : vector<1x1xf32>
    %cst_56 = arith.constant 1.000000e+00 : f32
    %120 = vector.broadcast %cst_56 : f32 to vector<1x1xf32>
    %121 = arith.addf %120, %119 : vector<1x1xf32>
    %122 = arith.divf %120, %121 : vector<1x1xf32>
    %123 = vector.broadcast %122 : vector<1x1xf32> to vector<24x32xf32>
    %124 = arith.mulf %123, %39 : vector<24x32xf32>
    %cst_57 = arith.constant 0.000000e+00 : f32
    %125 = vector.broadcast %cst_57 : f32 to vector<24x32xf32>
    %126 = arith.maximumf %124, %125 : vector<24x32xf32>
    %127 = vector.extract_strided_slice %95 {offsets = [2, 0], sizes = [1, 20], strides = [1, 1]} : vector<4x20xf32> to vector<1x20xf32>
    %128 = arith.mulf %94, %127 : vector<1x20xf32>
    %cst_58 = arith.constant dense<0.000000e+00> : vector<1xf32>
    %129 = vector.multi_reduction <add>, %128, %cst_58 [1] : vector<1x20xf32> to vector<1xf32>
    %130 = vector.shape_cast %129 : vector<1xf32> to vector<1x1xf32>
    %131 = vector.extract_strided_slice %96 {offsets = [0, 2], sizes = [1, 1], strides = [1, 1]} : vector<1x4xf32> to vector<1x1xf32>
    %132 = arith.addf %130, %131 : vector<1x1xf32>
    %133 = arith.negf %132 : vector<1x1xf32>
    %134 = math.exp %133 : vector<1x1xf32>
    %cst_59 = arith.constant 1.000000e+00 : f32
    %135 = vector.broadcast %cst_59 : f32 to vector<1x1xf32>
    %136 = arith.addf %135, %134 : vector<1x1xf32>
    %137 = arith.divf %135, %136 : vector<1x1xf32>
    %138 = vector.broadcast %137 : vector<1x1xf32> to vector<24x32xf32>
    %139 = arith.mulf %138, %26 : vector<24x32xf32>
    %cst_60 = arith.constant 0.000000e+00 : f32
    %140 = vector.broadcast %cst_60 : f32 to vector<24x32xf32>
    %141 = arith.maximumf %139, %140 : vector<24x32xf32>
    %142 = vector.extract_strided_slice %95 {offsets = [3, 0], sizes = [1, 20], strides = [1, 1]} : vector<4x20xf32> to vector<1x20xf32>
    %143 = arith.mulf %94, %142 : vector<1x20xf32>
    %cst_61 = arith.constant dense<0.000000e+00> : vector<1xf32>
    %144 = vector.multi_reduction <add>, %143, %cst_61 [1] : vector<1x20xf32> to vector<1xf32>
    %145 = vector.shape_cast %144 : vector<1xf32> to vector<1x1xf32>
    %146 = vector.extract_strided_slice %96 {offsets = [0, 3], sizes = [1, 1], strides = [1, 1]} : vector<1x4xf32> to vector<1x1xf32>
    %147 = arith.addf %145, %146 : vector<1x1xf32>
    %148 = arith.negf %147 : vector<1x1xf32>
    %149 = math.exp %148 : vector<1x1xf32>
    %cst_62 = arith.constant 1.000000e+00 : f32
    %150 = vector.broadcast %cst_62 : f32 to vector<1x1xf32>
    %151 = arith.addf %150, %149 : vector<1x1xf32>
    %152 = arith.divf %150, %151 : vector<1x1xf32>
    %153 = vector.broadcast %152 : vector<1x1xf32> to vector<24x32xf32>
    %154 = arith.mulf %153, %50 : vector<24x32xf32>
    %cst_63 = arith.constant 0.000000e+00 : f32
    %155 = vector.broadcast %cst_63 : f32 to vector<24x32xf32>
    %156 = arith.maximumf %154, %155 : vector<24x32xf32>
    %157 = tpu.concatenate %111, %126, %141, %156 in 1 : vector<24x32xf32>, vector<24x32xf32>, vector<24x32xf32>, vector<24x32xf32> -> vector<24x128xf32>
    %158 = arith.truncf %157 : vector<24x128xf32> to vector<24x128xbf16>
    %c0_64 = arith.constant 0 : index
    %c0_65 = arith.constant 0 : index
    %159 = vector.load %arg17[%c0_64, %c0_65] : memref<128x8xf32, #tpu.memory_space<vmem>>, vector<128x8xf32>
    %160 = arith.truncf %159 : vector<128x8xf32> to vector<128x8xbf16>
    %cst_66 = arith.constant dense<0.000000e+00> : vector<24x8xf32>
    %161 = tpu.matmul %158, %160, %cst_66 {dimension_numbers = #tpu.dot_dimension_numbers<[1], [0], [0], [1], [0, 0, 1, 1], [], []>} : vector<24x128xbf16>, vector<128x8xbf16>, vector<24x8xf32> -> vector<24x8xf32>
    %c0_67 = arith.constant 0 : index
    %c0_68 = arith.constant 0 : index
    %162 = vector.load %arg18[%c0_67, %c0_68] : memref<1x8xf32, #tpu.memory_space<vmem>>, vector<1x8xf32>
    %163 = vector.broadcast %162 : vector<1x8xf32> to vector<24x8xf32>
    %164 = arith.addf %161, %163 : vector<24x8xf32>
    %c0_69 = arith.constant 0 : index
    %c0_70 = arith.constant 0 : index
    %165 = vector.load %arg1[%c0_69, %c0_70] : memref<16x8xf32, #tpu.memory_space<vmem>>, vector<16x8xf32>
    %cst_71 = arith.constant dense<0.000000e+00> : vector<16x24xf32>
    %166 = tpu.matmul %165, %164, %cst_71 {dimension_numbers = #tpu.dot_dimension_numbers<[1], [1], [0], [0], [0, 0, 1, 0], [], []>} : vector<16x8xf32>, vector<24x8xf32>, vector<16x24xf32> -> vector<16x24xf32>
    %c0_72 = arith.constant 0 : index
    %c0_73 = arith.constant 0 : index
    %167 = vector.load %arg19[%c0_72, %c0_73] : memref<16x24xf32, #tpu.memory_space<vmem>>, vector<16x24xf32>
    tpu.vector_store %arg19[%c0_72, %c0_73], %166 {strides = array<i32>} : memref<16x24xf32, #tpu.memory_space<vmem>>, vector<16x24xf32>,
    return
  }
  func.func @transform_0(%arg0: i32) -> (i32, i32) {
    %c0_i32 = arith.constant 0 : i32
    %c0_i32_0 = arith.constant 0 : i32
    %c0_i32_1 = arith.constant 0 : i32
    return %c0_i32, %c0_i32_0 : i32, i32
  }
  func.func @transform_1(%arg0: i32) -> (i32, i32) {
    %c0_i32 = arith.constant 0 : i32
    %c0_i32_0 = arith.constant 0 : i32
    %c0_i32_1 = arith.constant 0 : i32
    return %c0_i32, %c0_i32_0 : i32, i32
  }
  func.func @transform_2(%arg0: i32) -> (i32, i32) {
    %c0_i32 = arith.constant 0 : i32
    %c0_i32_0 = arith.constant 0 : i32
    %c0_i32_1 = arith.constant 0 : i32
    return %c0_i32, %c0_i32_0 : i32, i32
  }
  func.func @transform_3(%arg0: i32) -> (i32, i32) {
    %c0_i32 = arith.constant 0 : i32
    %c0_i32_0 = arith.constant 0 : i32
    %c0_i32_1 = arith.constant 0 : i32
    return %c0_i32, %c0_i32_0 : i32, i32
  }
  func.func @transform_4(%arg0: i32) -> (i32, i32) {
    %c0_i32 = arith.constant 0 : i32
    %c0_i32_0 = arith.constant 0 : i32
    %c0_i32_1 = arith.constant 0 : i32
    return %c0_i32, %c0_i32_0 : i32, i32
  }
  func.func @transform_5(%arg0: i32) -> (i32, i32) {
    %c0_i32 = arith.constant 0 : i32
    %c0_i32_0 = arith.constant 0 : i32
    %c0_i32_1 = arith.constant 0 : i32
    return %c0_i32, %c0_i32_0 : i32, i32
  }
  func.func @transform_6(%arg0: i32) -> (i32, i32) {
    %c0_i32 = arith.constant 0 : i32
    %c0_i32_0 = arith.constant 0 : i32
    %c0_i32_1 = arith.constant 0 : i32
    return %c0_i32, %c0_i32_0 : i32, i32
  }
  func.func @transform_7(%arg0: i32) -> (i32, i32) {
    %c0_i32 = arith.constant 0 : i32
    %c0_i32_0 = arith.constant 0 : i32
    %c0_i32_1 = arith.constant 0 : i32
    return %c0_i32, %c0_i32_0 : i32, i32
  }
  func.func @transform_8(%arg0: i32) -> (i32, i32) {
    %c0_i32 = arith.constant 0 : i32
    %c0_i32_0 = arith.constant 0 : i32
    %c0_i32_1 = arith.constant 0 : i32
    return %c0_i32, %c0_i32_0 : i32, i32
  }
  func.func @transform_9(%arg0: i32) -> (i32, i32) {
    %c0_i32 = arith.constant 0 : i32
    %c0_i32_0 = arith.constant 0 : i32
    %c0_i32_1 = arith.constant 0 : i32
    return %c0_i32, %c0_i32_0 : i32, i32
  }
  func.func @transform_10(%arg0: i32) -> (i32, i32) {
    %c0_i32 = arith.constant 0 : i32
    %c0_i32_0 = arith.constant 0 : i32
    %c0_i32_1 = arith.constant 0 : i32
    return %c0_i32, %c0_i32_0 : i32, i32
  }
  func.func @transform_11(%arg0: i32) -> (i32, i32) {
    %c0_i32 = arith.constant 0 : i32
    %c0_i32_0 = arith.constant 0 : i32
    %c0_i32_1 = arith.constant 0 : i32
    return %c0_i32, %c0_i32_0 : i32, i32
  }
  func.func @transform_12(%arg0: i32) -> (i32, i32) {
    %c0_i32 = arith.constant 0 : i32
    %c0_i32_0 = arith.constant 0 : i32
    %c0_i32_1 = arith.constant 0 : i32
    return %c0_i32, %c0_i32_0 : i32, i32
  }
  func.func @transform_13(%arg0: i32) -> (i32, i32) {
    %c0_i32 = arith.constant 0 : i32
    %c0_i32_0 = arith.constant 0 : i32
    %c0_i32_1 = arith.constant 0 : i32
    return %c0_i32, %c0_i32_0 : i32, i32
  }
  func.func @transform_14(%arg0: i32) -> (i32, i32) {
    %c0_i32 = arith.constant 0 : i32
    %c0_i32_0 = arith.constant 0 : i32
    %c0_i32_1 = arith.constant 0 : i32
    return %c0_i32, %c0_i32_0 : i32, i32
  }
  func.func @transform_15(%arg0: i32) -> (i32, i32) {
    %c0_i32 = arith.constant 0 : i32
    %c0_i32_0 = arith.constant 0 : i32
    %c0_i32_1 = arith.constant 0 : i32
    return %c0_i32, %c0_i32_0 : i32, i32
  }
  func.func @transform_16(%arg0: i32) -> (i32, i32) {
    %c0_i32 = arith.constant 0 : i32
    %c0_i32_0 = arith.constant 0 : i32
    %c0_i32_1 = arith.constant 0 : i32
    return %c0_i32, %c0_i32_0 : i32, i32
  }
  func.func @transform_17(%arg0: i32) -> (i32, i32) {
    %c0_i32 = arith.constant 0 : i32
    %c0_i32_0 = arith.constant 0 : i32
    %c0_i32_1 = arith.constant 0 : i32
    return %c0_i32, %c0_i32_0 : i32, i32
  }
  func.func @transform_18(%arg0: i32) -> (i32, i32) {
    %c0_i32 = arith.constant 0 : i32
    %c0_i32_0 = arith.constant 0 : i32
    %c0_i32_1 = arith.constant 0 : i32
    return %c0_i32, %c0_i32_0 : i32, i32
  }
}

</mosaic_0001>

<llo_original>
// kernel: mmgcn_forward.2
$region0: #{mmgcn_forward.2}
  #allocation0 [shape = 'u32[]', space=smem, size = 0x4, offset = 0x4, fixed_abs, tag = 'smem constant byte address 0x4 - core index']
  #allocation1 [shape = 'u32[144,128]{1,0:T(1,128)}', space=vmem, size = 0x12000, scoped, tag = 'internal scratch']
  %s0 = inlined_call_operand.vmem [shape: f32[16,16], index: 0, kind: input, shape index: {}]
  %s1 = inlined_call_operand.vmem [shape: f32[16,16], index: 1, kind: input, shape index: {}]
  %s2 = inlined_call_operand.vmem [shape: f32[16,32], index: 2, kind: input, shape index: {}]
  %s3 = inlined_call_operand.vmem [shape: f32[32,32], index: 3, kind: input, shape index: {}]
  %s4 = inlined_call_operand.vmem [shape: f32[1,32], index: 4, kind: input, shape index: {}]
  %s5 = inlined_call_operand.vmem [shape: f32[32,32], index: 5, kind: input, shape index: {}]
  %s6 = inlined_call_operand.hbm [shape: f32[1,32], index: 6, kind: input, shape index: {}]
  %s7 = inlined_call_operand.vmem [shape: f32[32,32], index: 7, kind: input, shape index: {}]
  %s8 = inlined_call_operand.hbm [shape: f32[1,32], index: 8, kind: input, shape index: {}]
  %s9 = inlined_call_operand.vmem [shape: f32[32,32], index: 9, kind: input, shape index: {}]
  %s10 = inlined_call_operand.hbm [shape: f32[1,32], index: 10, kind: input, shape index: {}]
  %s11 = inlined_call_operand.hbm [shape: f32[4,20], index: 11, kind: input, shape index: {}]
  %s12 = inlined_call_operand.hbm [shape: f32[1,20], index: 12, kind: input, shape index: {}]
  %s13 = inlined_call_operand.hbm [shape: f32[4,20], index: 13, kind: input, shape index: {}]
  %s14 = inlined_call_operand.hbm [shape: f32[1,4], index: 14, kind: input, shape index: {}]
  %s15 = inlined_call_operand.vmem [shape: f32[128,8], index: 15, kind: input, shape index: {}]
  %s16 = inlined_call_operand.hbm [shape: f32[1,8], index: 16, kind: input, shape index: {}]
  %s17 = inlined_call_operand.vmem [shape: f32[16,8], index: 17, kind: output, shape index: {}]
  %s18 = sld [smem:[#allocation0]]
  $region110: #{mmgcn_forward.2} parent=0
    _
  %s20 = ssub.s32 1, %s18
  %s21 = scalar_select 0, %s20, %s18
  $region1: #{mmgcn_forward.2} parent=0
    #allocation2 [shape = 'u8[512]{0}', space=vmem, size = 0x400, scoped, tag = 'input window, operand 6, single buffered']
    #allocation3 [shape = 's32[1]{0}', space=sflag, size = 0x4, scoped, tag = 'scoped memory for mmgcn_forward.2']
    #allocation4 [shape = 'u8[512]{0}', space=vmem, size = 0x400, scoped, tag = 'input window, operand 8, single buffered']
    #allocation5 [shape = 's32[1]{0}', space=sflag, size = 0x4, scoped, tag = 'scoped memory for mmgcn_forward.2']
    #allocation6 [shape = 'u8[512]{0}', space=vmem, size = 0x400, scoped, tag = 'input window, operand 10, single buffered']
    #allocation7 [shape = 'u8[2048]{0}', space=vmem, size = 0x800, scoped, tag = 'input window, operand 11, single buffered']
    #allocation8 [shape = 's32[1]{0}', space=sflag, size = 0x4, scoped, tag = 'scoped memory for mmgcn_forward.2']
    #allocation9 [shape = 'u8[512]{0}', space=vmem, size = 0x400, scoped, tag = 'input window, operand 12, single buffered']
    #allocation10 [shape = 'u8[2048]{0}', space=vmem, size = 0x800, scoped, tag = 'input window, operand 13, single buffered']
    #allocation11 [shape = 's32[1]{0}', space=sflag, size = 0x4, scoped, tag = 'scoped memory for mmgcn_forward.2']
    #allocation12 [shape = 'u8[512]{0}', space=vmem, size = 0x400, scoped, tag = 'input window, operand 14, single buffered']
    #allocation13 [shape = 'u8[512]{0}', space=vmem, size = 0x400, scoped, tag = 'input window, operand 16, single buffered']
    #allocation14 [shape = 's32[1]{0}', space=sflag, size = 0x4, scoped, tag = 'scoped memory for mmgcn_forward.2']
    %22 = vsyncpa [#allocation3], 0
    %23 = vsyncpa [#allocation5], 0
    %24 = vsyncpa [#allocation8], 0
    %25 = vsyncpa [#allocation11], 0
    %26 = vsyncpa [#allocation14], 0
    // Predicated region
    $region2: #{mmgcn_forward.2} parent=1 // pred_check
      _
    $region3: #{mmgcn_forward.2} parent=1 // pred_check_branch
      %28 = sbr.rel (0) target = $region5
    $region4: #{mmgcn_forward.2} parent=1 // pred_region
      _
    $region5: #{mmgcn_forward.2} parent=1 // pred_fallthru
      _
    // Predicated region
    $region6: #{mmgcn_forward.2} parent=1 // pred_check
      _
    $region7: #{mmgcn_forward.2} parent=1 // pred_check_branch
      %30 = sbr.rel (0) target = $region9
    $region8: #{mmgcn_forward.2} parent=1 // pred_region
      _
    $region9: #{mmgcn_forward.2} parent=1 // pred_fallthru
      _
    // Predicated region
    $region10: #{mmgcn_forward.2} parent=1 // pred_check
      _
    $region11: #{mmgcn_forward.2} parent=1 // pred_check_branch
      %32 = sbr.rel (0) target = $region13
    $region12: #{mmgcn_forward.2} parent=1 // pred_region
      _
    $region13: #{mmgcn_forward.2} parent=1 // pred_fallthru
      _
    // Predicated region
    $region14: #{mmgcn_forward.2} parent=1 // pred_check
      _
    $region15: #{mmgcn_forward.2} parent=1 // pred_check_branch
      %34 = sbr.rel (0) target = $region17
    $region16: #{mmgcn_forward.2} parent=1 // pred_region
      _
    $region17: #{mmgcn_forward.2} parent=1 // pred_fallthru
      _
    // Predicated region
    $region18: #{mmgcn_forward.2} parent=1 // pred_check
      _
    $region19: #{mmgcn_forward.2} parent=1 // pred_check_branch
      %36 = sbr.rel (0) target = $region21
    $region20: #{mmgcn_forward.2} parent=1 // pred_region
      _
    $region21: #{mmgcn_forward.2} parent=1 // pred_fallthru
      _
    // Predicated region
    $region22: #{mmgcn_forward.2} parent=1 // pred_check
      _
    $region23: #{mmgcn_forward.2} parent=1 // pred_check_branch
      %38 = sbr.rel (0) target = $region25
    $region24: #{mmgcn_forward.2} parent=1 // pred_region
      _
    $region25: #{mmgcn_forward.2} parent=1 // pred_fallthru
      _
    // Predicated region
    $region26: #{mmgcn_forward.2} parent=1 // pred_check
      _
    $region27: #{mmgcn_forward.2} parent=1 // pred_check_branch
      %40 = sbr.rel (0) target = $region29
    $region28: #{mmgcn_forward.2} parent=1 // pred_region
      %s42 = ssub.s32 16, 16
      %43 = vsyncadd [#allocation3], %s42
      %s45 = sshll.u32 [#allocation2], 4
      %s46 = int_to_ptr.vmem [resolvable:$true] %s45
      %48 = dma.hbm_to_vmem [thread:$0]  %s6, 16, %s46, [#allocation3]
    $region29: #{mmgcn_forward.2} parent=1 // pred_fallthru
      _
    // Predicated region
    $region30: #{mmgcn_forward.2} parent=1 // pred_check
      _
    $region31: #{mmgcn_forward.2} parent=1 // pred_check_branch
      %50 = sbr.rel (0) target = $region33
    $region32: #{mmgcn_forward.2} parent=1 // pred_region
      _
    $region33: #{mmgcn_forward.2} parent=1 // pred_fallthru
      _
    // Predicated region
    $region34: #{mmgcn_forward.2} parent=1 // pred_check
      _
    $region35: #{mmgcn_forward.2} parent=1 // pred_check_branch
      %52 = sbr.rel (0) target = $region37
    $region36: #{mmgcn_forward.2} parent=1 // pred_region
      %s54 = ssub.s32 16, 16
      %55 = vsyncadd [#allocation5], %s54
      %s57 = sshll.u32 [#allocation4], 4
      %s58 = int_to_ptr.vmem [resolvable:$true] %s57
      %60 = dma.hbm_to_vmem [thread:$0]  %s8, 16, %s58, [#allocation5]
    $region37: #{mmgcn_forward.2} parent=1 // pred_fallthru
      _
    // Predicated region
    $region38: #{mmgcn_forward.2} parent=1 // pred_check
      _
    $region39: #{mmgcn_forward.2} parent=1 // pred_check_branch
      %62 = sbr.rel (0) target = $region41
    $region40: #{mmgcn_forward.2} parent=1 // pred_region
      _
    $region41: #{mmgcn_forward.2} parent=1 // pred_fallthru
      _
    // Predicated region
    $region42: #{mmgcn_forward.2} parent=1 // pred_check
      _
    $region43: #{mmgcn_forward.2} parent=1 // pred_check_branch
      %64 = sbr.rel (0) target = $region45
    $region44: #{mmgcn_forward.2} parent=1 // pred_region
      %s66 = ssub.s32 16, 16
      %67 = vsyncadd [#allocation5], %s66
      %s69 = sshll.u32 [#allocation6], 4
      %s70 = int_to_ptr.vmem [resolvable:$true] %s69
      %72 = dma.hbm_to_vmem [thread:$0]  %s10, 16, %s70, [#allocation5]
    $region45: #{mmgcn_forward.2} parent=1 // pred_fallthru
      _
    // Predicated region
    $region46: #{mmgcn_forward.2} parent=1 // pred_check
      _
    $region47: #{mmgcn_forward.2} parent=1 // pred_check_branch
      %74 = sbr.rel (0) target = $region49
    $region48: #{mmgcn_forward.2} parent=1 // pred_region
      %s76 = ssub.s32 64, 64
      %77 = vsyncadd [#allocation8], %s76
      %s79 = sshll.u32 [#allocation7], 4
      %s80 = int_to_ptr.vmem [resolvable:$true] %s79
      %82 = dma.hbm_to_vmem [thread:$0]  %s11, 64, %s80, [#allocation8]
    $region49: #{mmgcn_forward.2} parent=1 // pred_fallthru
      _
    // Predicated region
    $region50: #{mmgcn_forward.2} parent=1 // pred_check
      _
    $region51: #{mmgcn_forward.2} parent=1 // pred_check_branch
      %84 = sbr.rel (0) target = $region53
    $region52: #{mmgcn_forward.2} parent=1 // pred_region
      %s86 = ssub.s32 16, 16
      %87 = vsyncadd [#allocation8], %s86
      %s89 = sshll.u32 [#allocation9], 4
      %s90 = int_to_ptr.vmem [resolvable:$true] %s89
      %92 = dma.hbm_to_vmem [thread:$0]  %s12, 16, %s90, [#allocation8]
    $region53: #{mmgcn_forward.2} parent=1 // pred_fallthru
      _
    // Predicated region
    $region54: #{mmgcn_forward.2} parent=1 // pred_check
      _
    $region55: #{mmgcn_forward.2} parent=1 // pred_check_branch
      %94 = sbr.rel (0) target = $region57
    $region56: #{mmgcn_forward.2} parent=1 // pred_region
      %s96 = ssub.s32 64, 64
      %97 = vsyncadd [#allocation11], %s96
      %s99 = sshll.u32 [#allocation10], 4
      %s100 = int_to_ptr.vmem [resolvable:$true] %s99
      %102 = dma.hbm_to_vmem [thread:$0]  %s13, 64, %s100, [#allocation11]
    $region57: #{mmgcn_forward.2} parent=1 // pred_fallthru
      _
    // Predicated region
    $region58: #{mmgcn_forward.2} parent=1 // pred_check
      _
    $region59: #{mmgcn_forward.2} parent=1 // pred_check_branch
      %104 = sbr.rel (0) target = $region61
    $region60: #{mmgcn_forward.2} parent=1 // pred_region
      %s106 = ssub.s32 16, 16
      %107 = vsyncadd [#allocation11], %s106
      %s109 = sshll.u32 [#allocation12], 4
      %s110 = int_to_ptr.vmem [resolvable:$true] %s109
      %112 = dma.hbm_to_vmem [thread:$0]  %s14, 16, %s110, [#allocation11]
    $region61: #{mmgcn_forward.2} parent=1 // pred_fallthru
      _
    // Predicated region
    $region62: #{mmgcn_forward.2} parent=1 // pred_check
      _
    $region63: #{mmgcn_forward.2} parent=1 // pred_check_branch
      %114 = sbr.rel (0) target = $region65
    $region64: #{mmgcn_forward.2} parent=1 // pred_region
      _
    $region65: #{mmgcn_forward.2} parent=1 // pred_fallthru
      _
    // Predicated region
    $region66: #{mmgcn_forward.2} parent=1 // pred_check
      _
    $region67: #{mmgcn_forward.2} parent=1 // pred_check_branch
      %116 = sbr.rel (0) target = $region69
    $region68: #{mmgcn_forward.2} parent=1 // pred_region
      %s118 = ssub.s32 16, 16
      %119 = vsyncadd [#allocation14], %s118
      %s121 = sshll.u32 [#allocation13], 4
      %s122 = int_to_ptr.vmem [resolvable:$true] %s121
      %124 = dma.hbm_to_vmem [thread:$0]  %s16, 16, %s122, [#allocation14]
    $region69: #{mmgcn_forward.2} parent=1 // pred_fallthru
      _
    // Predicated region
    $region70: #{mmgcn_forward.2} parent=1 // pred_check
      _
    $region71: #{mmgcn_forward.2} parent=1 // pred_check_branch
      %126 = sbr.rel (0) target = $region73
    $region72: #{mmgcn_forward.2} parent=1 // pred_region
      %127 = dma.done [#allocation3], 16
    $region73: #{mmgcn_forward.2} parent=1 // pred_fallthru
      _
    // Predicated region
    $region74: #{mmgcn_forward.2} parent=1 // pred_check
      _
    $region75: #{mmgcn_forward.2} parent=1 // pred_check_branch
      %129 = sbr.rel (0) target = $region77
    $region76: #{mmgcn_forward.2} parent=1 // pred_region
      %130 = dma.done [#allocation5], 16
    $region77: #{mmgcn_forward.2} parent=1 // pred_fallthru
      _
    // Predicated region
    $region78: #{mmgcn_forward.2} parent=1 // pred_check
      _
    $region79: #{mmgcn_forward.2} parent=1 // pred_check_branch
      %132 = sbr.rel (0) target = $region81
    $region80: #{mmgcn_forward.2} parent=1 // pred_region
      %133 = dma.done [#allocation5], 16
    $region81: #{mmgcn_forward.2} parent=1 // pred_fallthru
      _
    // Predicated region
    $region82: #{mmgcn_forward.2} parent=1 // pred_check
      _
    $region83: #{mmgcn_forward.2} parent=1 // pred_check_branch
      %135 = sbr.rel (0) target = $region85
    $region84: #{mmgcn_forward.2} parent=1 // pred_region
      %136 = dma.done [#allocation8], 64
    $region85: #{mmgcn_forward.2} parent=1 // pred_fallthru
      _
    // Predicated region
    $region86: #{mmgcn_forward.2} parent=1 // pred_check
      _
    $region87: #{mmgcn_forward.2} parent=1 // pred_check_branch
      %138 = sbr.rel (0) target = $region89
    $region88: #{mmgcn_forward.2} parent=1 // pred_region
      %139 = dma.done [#allocation8], 16
    $region89: #{mmgcn_forward.2} parent=1 // pred_fallthru
      _
    // Predicated region
    $region90: #{mmgcn_forward.2} parent=1 // pred_check
      _
    $region91: #{mmgcn_forward.2} parent=1 // pred_check_branch
      %141 = sbr.rel (0) target = $region93
    $region92: #{mmgcn_forward.2} parent=1 // pred_region
      %142 = dma.done [#allocation11], 64
    $region93: #{mmgcn_forward.2} parent=1 // pred_fallthru
      _
    // Predicated region
    $region94: #{mmgcn_forward.2} parent=1 // pred_check
      _
    $region95: #{mmgcn_forward.2} parent=1 // pred_check_branch
      %144 = sbr.rel (0) target = $region97
    $region96: #{mmgcn_forward.2} parent=1 // pred_region
      %145 = dma.done [#allocation11], 16
    $region97: #{mmgcn_forward.2} parent=1 // pred_fallthru
      _
    // Predicated region
    $region98: #{mmgcn_forward.2} parent=1 // pred_check
      _
    $region99: #{mmgcn_forward.2} parent=1 // pred_check_branch
      %147 = sbr.rel (0) target = $region101
    $region100: #{mmgcn_forward.2} parent=1 // pred_region
      %148 = dma.done [#allocation14], 16
    $region101: #{mmgcn_forward.2} parent=1 // pred_fallthru
      _
    %v150 = vld [vmem:[%s0] sm:$0xff]
    %v151 = vld [vmem:[%s0 + $0x8] sm:$0xff]
    %v152 = vld [vmem:[%s1] sm:$0xff]
    %v153 = vld [vmem:[%s1 + $0x8] sm:$0xff]
    %v154 = vld [vmem:[%s2] sm:$0xff]
    %v155 = vld [vmem:[%s2 + $0x8] sm:$0xff]
    %v156 = vpack.c.bf16 %v151, %v150
    %v157 = vpack.c.bf16 %v153, %v152
    %v158 = vpack.c.bf16 %v155, %v154
    %vm159 = vcmask 130048
    %v161 = vsel %vm159, %v156, 0
    %v164 = vsel %vm159, %v157, 0
    %166 = vmatprep.subr.bf16.mxu0 0
    %167 = vmatpush1.bf16.msra.mxu0 %v158
    %168 = vmatprep.subr.bf16.mxu0 0
    %169 = vmatpush1.bf16.msra.mxu0 0
    %170 = vmatprep.subr.bf16.mxu0 0
    %171 = vmatpush1.bf16.msra.mxu0 0
    %172 = vmatprep.subr.bf16.mxu0 0
    %173 = vmatpush1.bf16.msra.mxu0 0
    %174 = vmatprep.subr.bf16.mxu0 0
    %175 = vmatpush1.bf16.msra.mxu0 0
    %176 = vmatprep.subr.bf16.mxu0 0
    %177 = vmatpush1.bf16.msra.mxu0 0
    %178 = vmatprep.subr.bf16.mxu0 0
    %179 = vmatpush1.bf16.msra.mxu0 0
    %180 = vmatprep.subr.bf16.mxu0 0
    %181 = vmatpush1.bf16.msra.mxu0 0
    %182 = vmatprep.subr.bf16.mxu0 0
    %183 = vmatpush1.bf16.msra.mxu0 0
    %184 = vmatprep.subr.bf16.mxu0 0
    %185 = vmatpush1.bf16.msra.mxu0 0
    %186 = vmatprep.subr.bf16.mxu0 0
    %187 = vmatpush1.bf16.msra.mxu0 0
    %188 = vmatprep.subr.bf16.mxu0 0
    %189 = vmatpush1.bf16.msra.mxu0 0
    %190 = vmatprep.subr.bf16.mxu0 0
    %191 = vmatpush1.bf16.msra.mxu0 0
    %192 = vmatprep.subr.bf16.mxu0 0
    %193 = vmatpush1.bf16.msra.mxu0 0
    %194 = vmatprep.subr.bf16.mxu0 0
    %195 = vmatpush1.bf16.msra.mxu0 0
    %196 = vmatprep.subr.bf16.mxu0 0
    %197 = vmatpush1.bf16.msra.mxu0 0
    %198 = vmatprep.mubr.bf16.mxu0 0
    %199 = vmatmul.mubr.bf16.gmra.mrb[0].mxu0 %v161
    %v200 = vpop.f32.mrb[0].mxu0
    %v201 = vadd.f32 0.0, %v200
    %v202 = vpop.f32.mrb[0].mxu0
    %v203 = vpop.f32.mrb[0].mxu0
    %v204 = vadd.f32 0.0, %v203
    %v205 = vpop.f32.mrb[0].mxu0
    %206 = vmatprep.mubr.bf16.mxu0 0
    %207 = vmatmul.mubr.bf16.gmra.mrb[0].mxu0 %v164
    %v208 = vpop.f32.mrb[0].mxu0
    %v209 = vadd.f32 0.0, %v208
    %v210 = vpop.f32.mrb[0].mxu0
    %v211 = vpop.f32.mrb[0].mxu0
    %v212 = vadd.f32 0.0, %v211
    %v213 = vpop.f32.mrb[0].mxu0
    %214 = vdwg.mxu0
    %v215 = vpack.c.bf16 %v204, %v201
    %v216 = vld [vmem:[%s3] sm:$0xff]
    %v217 = vld [vmem:[%s3 + $0x8] sm:$0xff]
    %v218 = vld [vmem:[%s3 + $0x10] sm:$0xff]
    %v219 = vld [vmem:[%s3 + $0x18] sm:$0xff]
    %v220 = vpack.c.bf16 %v217, %v216
    %v221 = vpack.c.bf16 %v219, %v218
    %v222 = vld [vmem:[%s4] sm:$0x1]
    %v224 = vlaneseq
    %v225 = vshrl.u32 %v224, 7
    %v226 = vsub.s32 0, %v225
    %v227 = vrot.slane %v222, %v226
    %vm229 = vcmask 261120
    %v231 = vsel %vm229, %v215, 0
    %233 = vmatprep.subr.bf16.mxu0 0
    %234 = vmatpush1.bf16.msra.mxu0 %v220
    %235 = vmatprep.subr.bf16.mxu0 0
    %236 = vmatpush1.bf16.msra.mxu0 %v221
    %237 = vmatprep.subr.bf16.mxu0 0
    %238 = vmatpush1.bf16.msra.mxu0 0
    %239 = vmatprep.subr.bf16.mxu0 0
    %240 = vmatpush1.bf16.msra.mxu0 0
    %241 = vmatprep.subr.bf16.mxu0 0
    %242 = vmatpush1.bf16.msra.mxu0 0
    %243 = vmatprep.subr.bf16.mxu0 0
    %244 = vmatpush1.bf16.msra.mxu0 0
    %245 = vmatprep.subr.bf16.mxu0 0
    %246 = vmatpush1.bf16.msra.mxu0 0
    %247 = vmatprep.subr.bf16.mxu0 0
    %248 = vmatpush1.bf16.msra.mxu0 0
    %249 = vmatprep.subr.bf16.mxu0 0
    %250 = vmatpush1.bf16.msra.mxu0 0
    %251 = vmatprep.subr.bf16.mxu0 0
    %252 = vmatpush1.bf16.msra.mxu0 0
    %253 = vmatprep.subr.bf16.mxu0 0
    %254 = vmatpush1.bf16.msra.mxu0 0
    %255 = vmatprep.subr.bf16.mxu0 0
    %256 = vmatpush1.bf16.msra.mxu0 0
    %257 = vmatprep.subr.bf16.mxu0 0
    %258 = vmatpush1.bf16.msra.mxu0 0
    %259 = vmatprep.subr.bf16.mxu0 0
    %260 = vmatpush1.bf16.msra.mxu0 0
    %261 = vmatprep.subr.bf16.mxu0 0
    %262 = vmatpush1.bf16.msra.mxu0 0
    %263 = vmatprep.subr.bf16.mxu0 0
    %264 = vmatpush1.bf16.msra.mxu0 0
    %265 = vmatprep.mubr.bf16.mxu0 0
    %266 = vmatmul.mubr.bf16.gmra.mrb[0].mxu0 %v231
    %v267 = vpop.f32.mrb[0].mxu0
    %v268 = vadd.f32 %v227, %v267
    %v269 = vpop.f32.mrb[0].mxu0
    %v270 = vpop.f32.mrb[0].mxu0
    %v271 = vadd.f32 %v227, %v270
    %v272 = vpop.f32.mrb[0].mxu0
    %273 = vdwg.mxu0
    %v274 = vmax.f32 %v268, 0.0
    %v275 = vmax.f32 %v271, 0.0
    %v276 = vpack.c.bf16 %v212, %v209
    %v277 = vld [vmem:[%s7] sm:$0xff]
    %v278 = vld [vmem:[%s7 + $0x8] sm:$0xff]
    %v279 = vld [vmem:[%s7 + $0x10] sm:$0xff]
    %v280 = vld [vmem:[%s7 + $0x18] sm:$0xff]
    %v281 = vpack.c.bf16 %v278, %v277
    %v282 = vpack.c.bf16 %v280, %v279
    %v283 = vld [vmem:[#allocation4] sm:$0x1]
    %v285 = vlaneseq
    %v286 = vshrl.u32 %v285, 7
    %v287 = vsub.s32 0, %v286
    %v288 = vrot.slane %v283, %v287
    %v291 = vsel %vm229, %v276, 0
    %293 = vmatprep.subr.bf16.mxu0 0
    %294 = vmatpush1.bf16.msra.mxu0 %v281
    %295 = vmatprep.subr.bf16.mxu0 0
    %296 = vmatpush1.bf16.msra.mxu0 %v282
    %297 = vmatprep.subr.bf16.mxu0 0
    %298 = vmatpush1.bf16.msra.mxu0 0
    %299 = vmatprep.subr.bf16.mxu0 0
    %300 = vmatpush1.bf16.msra.mxu0 0
    %301 = vmatprep.subr.bf16.mxu0 0
    %302 = vmatpush1.bf16.msra.mxu0 0
    %303 = vmatprep.subr.bf16.mxu0 0
    %304 = vmatpush1.bf16.msra.mxu0 0
    %305 = vmatprep.subr.bf16.mxu0 0
    %306 = vmatpush1.bf16.msra.mxu0 0
    %307 = vmatprep.subr.bf16.mxu0 0
    %308 = vmatpush1.bf16.msra.mxu0 0
    %309 = vmatprep.subr.bf16.mxu0 0
    %310 = vmatpush1.bf16.msra.mxu0 0
    %311 = vmatprep.subr.bf16.mxu0 0
    %312 = vmatpush1.bf16.msra.mxu0 0
    %313 = vmatprep.subr.bf16.mxu0 0
    %314 = vmatpush1.bf16.msra.mxu0 0
    %315 = vmatprep.subr.bf16.mxu0 0
    %316 = vmatpush1.bf16.msra.mxu0 0
    %317 = vmatprep.subr.bf16.mxu0 0
    %318 = vmatpush1.bf16.msra.mxu0 0
    %319 = vmatprep.subr.bf16.mxu0 0
    %320 = vmatpush1.bf16.msra.mxu0 0
    %321 = vmatprep.subr.bf16.mxu0 0
    %322 = vmatpush1.bf16.msra.mxu0 0
    %323 = vmatprep.subr.bf16.mxu0 0
    %324 = vmatpush1.bf16.msra.mxu0 0
    %325 = vmatprep.mubr.bf16.mxu0 0
    %326 = vmatmul.mubr.bf16.gmra.mrb[0].mxu0 %v291
    %v327 = vpop.f32.mrb[0].mxu0
    %v328 = vadd.f32 %v288, %v327
    %v329 = vpop.f32.mrb[0].mxu0
    %v330 = vpop.f32.mrb[0].mxu0
    %v331 = vadd.f32 %v288, %v330
    %v332 = vpop.f32.mrb[0].mxu0
    %333 = vdwg.mxu0
    %v334 = vmax.f32 %v328, 0.0
    %v335 = vmax.f32 %v331, 0.0
    %v336 = vpack.c.bf16 %v275, %v274
    %337 = vmatprep.subr.bf16.mxu0 0
    %338 = vmatpush1.bf16.msra.mxu0 %v336
    %339 = vmatprep.subr.bf16.mxu0 0
    %340 = vmatpush1.bf16.msra.mxu0 0
    %341 = vmatprep.subr.bf16.mxu0 0
    %342 = vmatpush1.bf16.msra.mxu0 0
    %343 = vmatprep.subr.bf16.mxu0 0
    %344 = vmatpush1.bf16.msra.mxu0 0
    %345 = vmatprep.subr.bf16.mxu0 0
    %346 = vmatpush1.bf16.msra.mxu0 0
    %347 = vmatprep.subr.bf16.mxu0 0
    %348 = vmatpush1.bf16.msra.mxu0 0
    %349 = vmatprep.subr.bf16.mxu0 0
    %350 = vmatpush1.bf16.msra.mxu0 0
    %351 = vmatprep.subr.bf16.mxu0 0
    %352 = vmatpush1.bf16.msra.mxu0 0
    %353 = vmatprep.subr.bf16.mxu0 0
    %354 = vmatpush1.bf16.msra.mxu0 0
    %355 = vmatprep.subr.bf16.mxu0 0
    %356 = vmatpush1.bf16.msra.mxu0 0
    %357 = vmatprep.subr.bf16.mxu0 0
    %358 = vmatpush1.bf16.msra.mxu0 0
    %359 = vmatprep.subr.bf16.mxu0 0
    %360 = vmatpush1.bf16.msra.mxu0 0
    %361 = vmatprep.subr.bf16.mxu0 0
    %362 = vmatpush1.bf16.msra.mxu0 0
    %363 = vmatprep.subr.bf16.mxu0 0
    %364 = vmatpush1.bf16.msra.mxu0 0
    %365 = vmatprep.subr.bf16.mxu0 0
    %366 = vmatpush1.bf16.msra.mxu0 0
    %367 = vmatprep.subr.bf16.mxu0 0
    %368 = vmatpush1.bf16.msra.mxu0 0
    %369 = vmatprep.mubr.bf16.mxu0 0
    %370 = vmatmul.mubr.bf16.gmra.mrb[0].mxu0 %v161
    %v371 = vpop.f32.mrb[0].mxu0
    %v372 = vadd.f32 0.0, %v371
    %v373 = vpop.f32.mrb[0].mxu0
    %v374 = vpop.f32.mrb[0].mxu0
    %v375 = vadd.f32 0.0, %v374
    %v376 = vpop.f32.mrb[0].mxu0
    %377 = vdwg.mxu0
    %v378 = vpack.c.bf16 %v375, %v372
    %v379 = vld [vmem:[%s5] sm:$0xff]
    %v380 = vld [vmem:[%s5 + $0x8] sm:$0xff]
    %v381 = vld [vmem:[%s5 + $0x10] sm:$0xff]
    %v382 = vld [vmem:[%s5 + $0x18] sm:$0xff]
    %v383 = vpack.c.bf16 %v380, %v379
    %v384 = vpack.c.bf16 %v382, %v381
    %v385 = vld [vmem:[#allocation2] sm:$0x1]
    %v387 = vlaneseq
    %v388 = vshrl.u32 %v387, 7
    %v389 = vsub.s32 0, %v388
    %v390 = vrot.slane %v385, %v389
    %v393 = vsel %vm229, %v378, 0
    %395 = vmatprep.subr.bf16.mxu0 0
    %396 = vmatpush1.bf16.msra.mxu0 %v383
    %397 = vmatprep.subr.bf16.mxu0 0
    %398 = vmatpush1.bf16.msra.mxu0 %v384
    %399 = vmatprep.subr.bf16.mxu0 0
    %400 = vmatpush1.bf16.msra.mxu0 0
    %401 = vmatprep.subr.bf16.mxu0 0
    %402 = vmatpush1.bf16.msra.mxu0 0
    %403 = vmatprep.subr.bf16.mxu0 0
    %404 = vmatpush1.bf16.msra.mxu0 0
    %405 = vmatprep.subr.bf16.mxu0 0
    %406 = vmatpush1.bf16.msra.mxu0 0
    %407 = vmatprep.subr.bf16.mxu0 0
    %408 = vmatpush1.bf16.msra.mxu0 0
    %409 = vmatprep.subr.bf16.mxu0 0
    %410 = vmatpush1.bf16.msra.mxu0 0
    %411 = vmatprep.subr.bf16.mxu0 0
    %412 = vmatpush1.bf16.msra.mxu0 0
    %413 = vmatprep.subr.bf16.mxu0 0
    %414 = vmatpush1.bf16.msra.mxu0 0
    %415 = vmatprep.subr.bf16.mxu0 0
    %416 = vmatpush1.bf16.msra.mxu0 0
    %417 = vmatprep.subr.bf16.mxu0 0
    %418 = vmatpush1.bf16.msra.mxu0 0
    %419 = vmatprep.subr.bf16.mxu0 0
    %420 = vmatpush1.bf16.msra.mxu0 0
    %421 = vmatprep.subr.bf16.mxu0 0
    %422 = vmatpush1.bf16.msra.mxu0 0
    %423 = vmatprep.subr.bf16.mxu0 0
    %424 = vmatpush1.bf16.msra.mxu0 0
    %425 = vmatprep.subr.bf16.mxu0 0
    %426 = vmatpush1.bf16.msra.mxu0 0
    %427 = vmatprep.mubr.bf16.mxu0 0
    %428 = vmatmul.mubr.bf16.gmra.mrb[0].mxu0 %v393
    %v429 = vpop.f32.mrb[0].mxu0
    %v430 = vadd.f32 %v390, %v429
    %v431 = vpop.f32.mrb[0].mxu0
    %v432 = vpop.f32.mrb[0].mxu0
    %v433 = vadd.f32 %v390, %v432
    %v434 = vpop.f32.mrb[0].mxu0
    %435 = vdwg.mxu0
    %v436 = vmax.f32 %v430, 0.0
    %v437 = vmax.f32 %v433, 0.0
    %v438 = vpack.c.bf16 %v335, %v334
    %439 = vmatprep.subr.bf16.mxu0 0
    %440 = vmatpush1.bf16.msra.mxu0 %v438
    %441 = vmatprep.subr.bf16.mxu0 0
    %442 = vmatpush1.bf16.msra.mxu0 0
    %443 = vmatprep.subr.bf16.mxu0 0
    %444 = vmatpush1.bf16.msra.mxu0 0
    %445 = vmatprep.subr.bf16.mxu0 0
    %446 = vmatpush1.bf16.msra.mxu0 0
    %447 = vmatprep.subr.bf16.mxu0 0
    %448 = vmatpush1.bf16.msra.mxu0 0
    %449 = vmatprep.subr.bf16.mxu0 0
    %450 = vmatpush1.bf16.msra.mxu0 0
    %451 = vmatprep.subr.bf16.mxu0 0
    %452 = vmatpush1.bf16.msra.mxu0 0
    %453 = vmatprep.subr.bf16.mxu0 0
    %454 = vmatpush1.bf16.msra.mxu0 0
    %455 = vmatprep.subr.bf16.mxu0 0
    %456 = vmatpush1.bf16.msra.mxu0 0
    %457 = vmatprep.subr.bf16.mxu0 0
    %458 = vmatpush1.bf16.msra.mxu0 0
    %459 = vmatprep.subr.bf16.mxu0 0
    %460 = vmatpush1.bf16.msra.mxu0 0
    %461 = vmatprep.subr.bf16.mxu0 0
    %462 = vmatpush1.bf16.msra.mxu0 0
    %463 = vmatprep.subr.bf16.mxu0 0
    %464 = vmatpush1.bf16.msra.mxu0 0
    %465 = vmatprep.subr.bf16.mxu0 0
    %466 = vmatpush1.bf16.msra.mxu0 0
    %467 = vmatprep.subr.bf16.mxu0 0
    %468 = vmatpush1.bf16.msra.mxu0 0
    %469 = vmatprep.subr.bf16.mxu0 0
    %470 = vmatpush1.bf16.msra.mxu0 0
    %471 = vmatprep.mubr.bf16.mxu0 0
    %472 = vmatmul.mubr.bf16.gmra.mrb[0].mxu0 %v164
    %v473 = vpop.f32.mrb[0].mxu0
    %v474 = vadd.f32 0.0, %v473
    %v475 = vpop.f32.mrb[0].mxu0
    %v476 = vpop.f32.mrb[0].mxu0
    %v477 = vadd.f32 0.0, %v476
    %v478 = vpop.f32.mrb[0].mxu0
    %479 = vdwg.mxu0
    %v480 = vpack.c.bf16 %v477, %v474
    %v481 = vld [vmem:[%s9] sm:$0xff]
    %v482 = vld [vmem:[%s9 + $0x8] sm:$0xff]
    %v483 = vld [vmem:[%s9 + $0x10] sm:$0xff]
    %v484 = vld [vmem:[%s9 + $0x18] sm:$0xff]
    %v485 = vpack.c.bf16 %v482, %v481
    %v486 = vpack.c.bf16 %v484, %v483
    %v487 = vld [vmem:[#allocation6] sm:$0x1]
    %v489 = vlaneseq
    %v490 = vshrl.u32 %v489, 7
    %v491 = vsub.s32 0, %v490
    %v492 = vrot.slane %v487, %v491
    %v495 = vsel %vm229, %v480, 0
    %497 = vmatprep.subr.bf16.mxu0 0
    %498 = vmatpush1.bf16.msra.mxu0 %v485
    %499 = vmatprep.subr.bf16.mxu0 0
    %500 = vmatpush1.bf16.msra.mxu0 %v486
    %501 = vmatprep.subr.bf16.mxu0 0
    %502 = vmatpush1.bf16.msra.mxu0 0
    %503 = vmatprep.subr.bf16.mxu0 0
    %504 = vmatpush1.bf16.msra.mxu0 0
    %505 = vmatprep.subr.bf16.mxu0 0
    %506 = vmatpush1.bf16.msra.mxu0 0
    %507 = vmatprep.subr.bf16.mxu0 0
    %508 = vmatpush1.bf16.msra.mxu0 0
    %509 = vmatprep.subr.bf16.mxu0 0
    %510 = vmatpush1.bf16.msra.mxu0 0
    %511 = vmatprep.subr.bf16.mxu0 0
    %512 = vmatpush1.bf16.msra.mxu0 0
    %513 = vmatprep.subr.bf16.mxu0 0
    %514 = vmatpush1.bf16.msra.mxu0 0
    %515 = vmatprep.subr.bf16.mxu0 0
    %516 = vmatpush1.bf16.msra.mxu0 0
    %517 = vmatprep.subr.bf16.mxu0 0
    %518 = vmatpush1.bf16.msra.mxu0 0
    %519 = vmatprep.subr.bf16.mxu0 0
    %520 = vmatpush1.bf16.msra.mxu0 0
    %521 = vmatprep.subr.bf16.mxu0 0
    %522 = vmatpush1.bf16.msra.mxu0 0
    %523 = vmatprep.subr.bf16.mxu0 0
    %524 = vmatpush1.bf16.msra.mxu0 0
    %525 = vmatprep.subr.bf16.mxu0 0
    %526 = vmatpush1.bf16.msra.mxu0 0
    %527 = vmatprep.subr.bf16.mxu0 0
    %528 = vmatpush1.bf16.msra.mxu0 0
    %529 = vmatprep.mubr.bf16.mxu0 0
    %530 = vmatmul.mubr.bf16.gmra.mrb[0].mxu0 %v495
    %v531 = vpop.f32.mrb[0].mxu0
    %v532 = vadd.f32 %v492, %v531
    %v533 = vpop.f32.mrb[0].mxu0
    %v534 = vpop.f32.mrb[0].mxu0
    %v535 = vadd.f32 %v492, %v534
    %v536 = vpop.f32.mrb[0].mxu0
    %537 = vdwg.mxu0
    %v538 = vmax.f32 %v532, 0.0
    %v539 = vmax.f32 %v535, 0.0
    %v540 = vsel %vm229, %v274, 0.0
    %541 = vadd.xlane.f32.xlu0 %v540
    %v542 = vpop.xlane.xlu0 %541
    %v543 = vsel %vm229, %v275, 0.0
    %544 = vadd.xlane.f32.xlu0 %v543
    %v545 = vpop.xlane.xlu0 %544
    %v546 = vadd.f32 %v542, %v545
    %v547 = vrot.slane %v546, 4
    %v548 = vadd.f32 %v546, %v547
    %v549 = vrot.slane %v548, 2
    %v550 = vadd.f32 %v548, %v549
    %v551 = vrot.slane %v550, 1
    %v552 = vadd.f32 %v550, %v551
    %v553 = vmul.f32 %v552, 0.001953125
    %v554 = vsel %vm229, %v436, 0.0
    %555 = vadd.xlane.f32.xlu0 %v554
    %v556 = vpop.xlane.xlu0 %555
    %v557 = vsel %vm229, %v437, 0.0
    %558 = vadd.xlane.f32.xlu0 %v557
    %v559 = vpop.xlane.xlu0 %558
    %v560 = vadd.f32 %v556, %v559
    %v561 = vrot.slane %v560, 4
    %v562 = vadd.f32 %v560, %v561
    %v563 = vrot.slane %v562, 2
    %v564 = vadd.f32 %v562, %v563
    %v565 = vrot.slane %v564, 1
    %v566 = vadd.f32 %v564, %v565
    %v567 = vmul.f32 %v566, 0.001953125
    %v568 = vsel %vm229, %v334, 0.0
    %569 = vadd.xlane.f32.xlu0 %v568
    %v570 = vpop.xlane.xlu0 %569
    %v571 = vsel %vm229, %v335, 0.0
    %572 = vadd.xlane.f32.xlu0 %v571
    %v573 = vpop.xlane.xlu0 %572
    %v574 = vadd.f32 %v570, %v573
    %v575 = vrot.slane %v574, 4
    %v576 = vadd.f32 %v574, %v575
    %v577 = vrot.slane %v576, 2
    %v578 = vadd.f32 %v576, %v577
    %v579 = vrot.slane %v578, 1
    %v580 = vadd.f32 %v578, %v579
    %v581 = vmul.f32 %v580, 0.001953125
    %v582 = vsel %vm229, %v538, 0.0
    %583 = vadd.xlane.f32.xlu0 %v582
    %v584 = vpop.xlane.xlu0 %583
    %v585 = vsel %vm229, %v539, 0.0
    %586 = vadd.xlane.f32.xlu0 %v585
    %v587 = vpop.xlane.xlu0 %586
    %v588 = vadd.f32 %v584, %v587
    %v589 = vrot.slane %v588, 4
    %v590 = vadd.f32 %v588, %v589
    %v591 = vrot.slane %v590, 2
    %v592 = vadd.f32 %v590, %v591
    %v593 = vrot.slane %v592, 1
    %v594 = vadd.f32 %v592, %v593
    %v595 = vmul.f32 %v594, 0.001953125
    %v596 = vld [vmem:[#allocation7] sm:$0xf]
    %v597 = vld [vmem:[#allocation9] sm:$0x1]
    %v598 = vmul.f32 %v553, %v596
    %v599 = vadd.f32 %v597, %v598
    %v600 = vmul.f32 %v567, %v596
    %v603 = vunpack.c.l.s4 1966171168
    %v604 = vunpack.c.0.s8 %v603
    %v605 = vlaneseq
    %v606 = vshrl.u32 %v605, 7
    %v607 = vsub.s32 %v604, %v606
    %v608 = vrot.slane %v600, %v607
    %v609 = vcombine.high %v608, %v608
    %v611 = vunpack.c.l.s4 1966171168
    %v612 = vunpack.c.0.s8 %v611
    %v613 = vlaneseq
    %v614 = vshrl.u32 %v613, 7
    %v615 = vsub.s32 %v612, %v614
    %v616 = vrot.slane %v609, %v615
    %v618 = vadd.f32 %v599, %v616
    %v619 = vmul.f32 %v581, %v596
    %v622 = vunpack.c.l.s4 1966171168
    %v623 = vunpack.c.0.s8 %v622
    %v624 = vlaneseq
    %v625 = vshrl.u32 %v624, 7
    %v626 = vsub.s32 %v623, %v625
    %v627 = vrot.slane %v619, %v626
    %v629 = vunpack.c.l.s4 1966171168
    %v630 = vunpack.c.0.s8 %v629
    %v631 = vlaneseq
    %v632 = vshrl.u32 %v631, 7
    %v633 = vsub.s32 %v630, %v632
    %v634 = vrot.slane %v627, %v633
    %v635 = vcombine.high %v634, %v634
    %v637 = vadd.f32 %v618, %v635
    %v638 = vmul.f32 %v595, %v596
    %v641 = vunpack.c.l.s4 1966171168
    %v642 = vunpack.c.0.s8 %v641
    %v643 = vlaneseq
    %v644 = vshrl.u32 %v643, 7
    %v645 = vsub.s32 %v642, %v644
    %v646 = vrot.slane %v638, %v645
    %v647 = vcombine.high %v646, %v646
    %v649 = vunpack.c.l.s4 1966171168
    %v650 = vunpack.c.0.s8 %v649
    %v651 = vlaneseq
    %v652 = vshrl.u32 %v651, 7
    %v653 = vsub.s32 %v650, %v652
    %v654 = vrot.slane %v647, %v653
    %v655 = vcombine.high %v654, %v654
    %v657 = vadd.f32 %v637, %v655
    %v658 = vmax.f32 %v657, 0.0
    %v659 = vld [vmem:[#allocation10] sm:$0xf]
    %v660 = vld [vmem:[#allocation12] sm:$0x1]
    %v661 = vmul.f32 %v658, %v659
    %vm662 = vcmask 155648
    %v663 = vsel %vm662, %v661, 0.0
    %664 = vadd.xlane.f32.xlu0 %v663
    %v665 = vpop.xlane.xlu0 %664
    %v666 = vadd.f32 %v665, %v660
    %v667 = vxor.u32 %v666, 2147483648
    %v668 = vmul.f32 %v667, 1.442695
    %v669 = vpow.pop %v668
    %v670 = vadd.f32 %v669, 1.0
    %v671 = vrcp.pop %v670
    %v672 = vmul.f32 1.0, %v671
    %s674 = vtos %v672
    %v675 = vstv %s674
    %v677 = vmul.f32 %v675, %v274
    %v678 = vmul.f32 %v675, %v275
    %v679 = vmax.f32 %v677, 0.0
    %v680 = vmax.f32 %v678, 0.0
    %v683 = vunpack.c.l.s4 1966171168
    %v684 = vunpack.c.0.s8 %v683
    %v685 = vlaneseq
    %v686 = vshrl.u32 %v685, 7
    %v687 = vsub.s32 %v684, %v686
    %v688 = vrot.slane %v659, %v687
    %v689 = vcombine.high %v688, %v688
    %v691 = vunpack.c.l.s4 1966171168
    %v692 = vunpack.c.0.s8 %v691
    %v693 = vlaneseq
    %v694 = vshrl.u32 %v693, 7
    %v695 = vsub.s32 %v692, %v694
    %v696 = vrot.slane %v688, %v695
    %v698 = vunpack.c.l.s4 1966171168
    %v699 = vunpack.c.0.s8 %v698
    %v700 = vlaneseq
    %v701 = vshrl.u32 %v700, 7
    %v702 = vsub.s32 %v699, %v701
    %v703 = vrot.slane %v689, %v702
    %v705 = vmul.f32 %v658, %v703
    %v706 = vsel %vm662, %v705, 0.0
    %707 = vadd.xlane.f32.xlu0 %v706
    %v708 = vpop.xlane.xlu0 %707
    %v710 = vlaneseq
    %v711 = vshrl.u32 %v710, 7
    %v712 = vsub.s32 0, %v711
    %v713 = vrot.slane %v660, %v712
    %714 = vrot.lane.b32.xlu0 %v713, 127
    %v715 = vpop.permute.xlu0 %714
    %v717 = vadd.f32 %v708, %v715
    %v718 = vxor.u32 %v717, 2147483648
    %v719 = vmul.f32 %v718, 1.442695
    %v720 = vpow.pop %v719
    %v721 = vadd.f32 %v720, 1.0
    %v722 = vrcp.pop %v721
    %v723 = vmul.f32 1.0, %v722
    %s725 = vtos %v723
    %v726 = vstv %s725
    %v728 = vmul.f32 %v726, %v436
    %v729 = vmul.f32 %v726, %v437
    %v730 = vmax.f32 %v728, 0.0
    %v731 = vmax.f32 %v729, 0.0
    %v732 = vcombine.high %v696, %v696
    %v734 = vmul.f32 %v658, %v732
    %v735 = vsel %vm662, %v734, 0.0
    %736 = vadd.xlane.f32.xlu0 %v735
    %v737 = vpop.xlane.xlu0 %736
    %738 = vrot.lane.b32.xlu0 %v713, 126
    %v739 = vpop.permute.xlu0 %738
    %v741 = vadd.f32 %v737, %v739
    %v742 = vxor.u32 %v741, 2147483648
    %v743 = vmul.f32 %v742, 1.442695
    %v744 = vpow.pop %v743
    %v745 = vadd.f32 %v744, 1.0
    %v746 = vrcp.pop %v745
    %v747 = vmul.f32 1.0, %v746
    %s749 = vtos %v747
    %v750 = vstv %s749
    %v752 = vmul.f32 %v750, %v334
    %v753 = vmul.f32 %v750, %v335
    %v754 = vmax.f32 %v752, 0.0
    %v755 = vmax.f32 %v753, 0.0
    %v756 = vcombine.high %v703, %v703
    %v758 = vmul.f32 %v658, %v756
    %v759 = vsel %vm662, %v758, 0.0
    %760 = vadd.xlane.f32.xlu0 %v759
    %v761 = vpop.xlane.xlu0 %760
    %762 = vrot.lane.b32.xlu0 %v713, 125
    %v763 = vpop.permute.xlu0 %762
    %v765 = vadd.f32 %v761, %v763
    %v766 = vxor.u32 %v765, 2147483648
    %v767 = vmul.f32 %v766, 1.442695
    %v768 = vpow.pop %v767
    %v769 = vadd.f32 %v768, 1.0
    %v770 = vrcp.pop %v769
    %v771 = vmul.f32 1.0, %v770
    %s773 = vtos %v771
    %v774 = vstv %s773
    %v776 = vmul.f32 %v774, %v538
    %v777 = vmul.f32 %v774, %v539
    %v778 = vmax.f32 %v776, 0.0
    %v779 = vmax.f32 %v777, 0.0
    %782 = vrot.lane.b32.xlu0 %v730, 32
    %v783 = vpop.permute.xlu0 %782
    %784 = vrot.lane.b32.xlu0 %v731, 32
    %v785 = vpop.permute.xlu0 %784
    %790 = vrot.lane.b32.xlu0 %v754, 64
    %v791 = vpop.permute.xlu0 %790
    %792 = vrot.lane.b32.xlu0 %v755, 64
    %v793 = vpop.permute.xlu0 %792
    %798 = vrot.lane.b32.xlu0 %v778, 96
    %v799 = vpop.permute.xlu0 %798
    %800 = vrot.lane.b32.xlu0 %v779, 96
    %v801 = vpop.permute.xlu0 %800
    %v804 = vsel %vm229, %v679, %v783
    %v805 = vsel %vm229, %v680, %v785
    %vm806 = vcmask 523264
    %v807 = vsel %vm806, %v804, %v791
    %v808 = vsel %vm806, %v805, %v793
    %vm809 = vcmask 785408
    %v810 = vsel %vm809, %v807, %v799
    %v811 = vsel %vm809, %v808, %v801
    %v812 = vpack.c.bf16 %v811, %v810
    %v813 = vld [vmem:[%s15] sm:$0xff]
    %v814 = vld [vmem:[%s15 + $0x8] sm:$0xff]
    %v815 = vld [vmem:[%s15 + $0x10] sm:$0xff]
    %v816 = vld [vmem:[%s15 + $0x18] sm:$0xff]
    %v817 = vld [vmem:[%s15 + $0x20] sm:$0xff]
    %v818 = vld [vmem:[%s15 + $0x28] sm:$0xff]
    %v819 = vld [vmem:[%s15 + $0x30] sm:$0xff]
    %v820 = vld [vmem:[%s15 + $0x38] sm:$0xff]
    %v821 = vld [vmem:[%s15 + $0x40] sm:$0xff]
    %v822 = vld [vmem:[%s15 + $0x48] sm:$0xff]
    %v823 = vld [vmem:[%s15 + $0x50] sm:$0xff]
    %v824 = vld [vmem:[%s15 + $0x58] sm:$0xff]
    %v825 = vld [vmem:[%s15 + $0x60] sm:$0xff]
    %v826 = vld [vmem:[%s15 + $0x68] sm:$0xff]
    %v827 = vld [vmem:[%s15 + $0x70] sm:$0xff]
    %v828 = vld [vmem:[%s15 + $0x78] sm:$0xff]
    %v829 = vpack.c.bf16 %v814, %v813
    %v830 = vpack.c.bf16 %v816, %v815
    %v831 = vpack.c.bf16 %v818, %v817
    %v832 = vpack.c.bf16 %v820, %v819
    %v833 = vpack.c.bf16 %v822, %v821
    %v834 = vpack.c.bf16 %v824, %v823
    %v835 = vpack.c.bf16 %v826, %v825
    %v836 = vpack.c.bf16 %v828, %v827
    %v837 = vld [vmem:[#allocation13] sm:$0x1]
    %v839 = vlaneseq
    %v840 = vshrl.u32 %v839, 7
    %v841 = vsub.s32 0, %v840
    %v842 = vrot.slane %v837, %v841
    %844 = vmatprep.subr.bf16.mxu0 0
    %845 = vmatpush1.bf16.msra.mxu0 %v829
    %846 = vmatprep.subr.bf16.mxu0 0
    %847 = vmatpush1.bf16.msra.mxu0 %v830
    %848 = vmatprep.subr.bf16.mxu0 0
    %849 = vmatpush1.bf16.msra.mxu0 %v831
    %850 = vmatprep.subr.bf16.mxu0 0
    %851 = vmatpush1.bf16.msra.mxu0 %v832
    %852 = vmatprep.subr.bf16.mxu0 0
    %853 = vmatpush1.bf16.msra.mxu0 %v833
    %854 = vmatprep.subr.bf16.mxu0 0
    %855 = vmatpush1.bf16.msra.mxu0 %v834
    %856 = vmatprep.subr.bf16.mxu0 0
    %857 = vmatpush1.bf16.msra.mxu0 %v835
    %858 = vmatprep.subr.bf16.mxu0 0
    %859 = vmatpush1.bf16.msra.mxu0 %v836
    %860 = vmatprep.subr.bf16.mxu0 0
    %861 = vmatpush1.bf16.msra.mxu0 0
    %862 = vmatprep.subr.bf16.mxu0 0
    %863 = vmatpush1.bf16.msra.mxu0 0
    %864 = vmatprep.subr.bf16.mxu0 0
    %865 = vmatpush1.bf16.msra.mxu0 0
    %866 = vmatprep.subr.bf16.mxu0 0
    %867 = vmatpush1.bf16.msra.mxu0 0
    %868 = vmatprep.subr.bf16.mxu0 0
    %869 = vmatpush1.bf16.msra.mxu0 0
    %870 = vmatprep.subr.bf16.mxu0 0
    %871 = vmatpush1.bf16.msra.mxu0 0
    %872 = vmatprep.subr.bf16.mxu0 0
    %873 = vmatpush1.bf16.msra.mxu0 0
    %874 = vmatprep.subr.bf16.mxu0 0
    %875 = vmatpush1.bf16.msra.mxu0 0
    %876 = vmatprep.mubr.bf16.mxu0 0
    %877 = vmatmul.mubr.bf16.gmra.mrb[0].mxu0 %v812
    %v878 = vpop.f32.mrb[0].mxu0
    %v879 = vadd.f32 %v842, %v878
    %v880 = vpop.f32.mrb[0].mxu0
    %v881 = vpop.f32.mrb[0].mxu0
    %v882 = vadd.f32 %v842, %v881
    %v883 = vpop.f32.mrb[0].mxu0
    %884 = vdwg.mxu0
    %vm885 = vcmask 64512
    %886 = vst.msk [vmem:[%s17] sm:$0xff] %vm885, %v879
    %887 = vst.msk [vmem:[%s17 + $0x8] sm:$0xff] %vm885, %v882
    // Predicated region
    $region102: #{mmgcn_forward.2} parent=1 // pred_check
      _
    $region103: #{mmgcn_forward.2} parent=1 // pred_check_branch
      %889 = sbr.rel (0) target = $region105
    $region104: #{mmgcn_forward.2} parent=1 // pred_region
      _
    $region105: #{mmgcn_forward.2} parent=1 // pred_fallthru
      _
    // Predicated region
    $region106: #{mmgcn_forward.2} parent=1 // pred_check
      _
    $region107: #{mmgcn_forward.2} parent=1 // pred_check_branch
      %891 = sbr.rel (0) target = $region109
    $region108: #{mmgcn_forward.2} parent=1 // pred_region
      _
    $region109: #{mmgcn_forward.2} parent=1 // pred_fallthru
      _
    %892 = vsyncpa [#allocation3], 1
    %893 = vsyncpa [#allocation5], 1
    %894 = vsyncpa [#allocation8], 1
    %895 = vsyncpa [#allocation11], 1
    %896 = vsyncpa [#allocation14], 1

// kernel: mmgcn_forward.3
$region0: #{mmgcn_forward.3}
  #allocation0 [shape = 'u32[]', space=smem, size = 0x4, offset = 0x4, fixed_abs, tag = 'smem constant byte address 0x4 - core index']
  #allocation1 [shape = 'u32[144,128]{1,0:T(1,128)}', space=vmem, size = 0x12000, scoped, tag = 'internal scratch']
  %s0 = inlined_call_operand.vmem [shape: f32[16,8], index: 0, kind: input, shape index: {}]
  %s1 = inlined_call_operand.vmem [shape: f32[24,24], index: 1, kind: input, shape index: {}]
  %s2 = inlined_call_operand.vmem [shape: f32[24,24], index: 2, kind: input, shape index: {}]
  %s3 = inlined_call_operand.vmem [shape: f32[24,32], index: 3, kind: input, shape index: {}]
  %s4 = inlined_call_operand.vmem [shape: f32[32,32], index: 4, kind: input, shape index: {}]
  %s5 = inlined_call_operand.vmem [shape: f32[1,32], index: 5, kind: input, shape index: {}]
  %s6 = inlined_call_operand.vmem [shape: f32[32,32], index: 6, kind: input, shape index: {}]
  %s7 = inlined_call_operand.vmem [shape: f32[1,32], index: 7, kind: input, shape index: {}]
  %s8 = inlined_call_operand.vmem [shape: f32[32,32], index: 8, kind: input, shape index: {}]
  %s9 = inlined_call_operand.vmem [shape: f32[1,32], index: 9, kind: input, shape index: {}]
  %s10 = inlined_call_operand.vmem [shape: f32[32,32], index: 10, kind: input, shape index: {}]
  %s11 = inlined_call_operand.vmem [shape: f32[1,32], index: 11, kind: input, shape index: {}]
  %s12 = inlined_call_operand.vmem [shape: f32[4,20], index: 12, kind: input, shape index: {}]
  %s13 = inlined_call_operand.vmem [shape: f32[1,20], index: 13, kind: input, shape index: {}]
  %s14 = inlined_call_operand.vmem [shape: f32[4,20], index: 14, kind: input, shape index: {}]
  %s15 = inlined_call_operand.vmem [shape: f32[1,4], index: 15, kind: input, shape index: {}]
  %s16 = inlined_call_operand.vmem [shape: f32[128,8], index: 16, kind: input, shape index: {}]
  %s17 = inlined_call_operand.vmem [shape: f32[1,8], index: 17, kind: input, shape index: {}]
  %s18 = inlined_call_operand.hbm [shape: f32[16,24], index: 18, kind: output, shape index: {}]
  %s19 = sld [smem:[#allocation0]]
  $region82: #{mmgcn_forward.3} parent=0
    _
  %s21 = ssub.s32 1, %s19
  %s22 = scalar_select 0, %s21, %s19
  $region1: #{mmgcn_forward.3} parent=0
    #allocation2 [shape = 'u8[8192]{0}', space=vmem, size = 0x2000, scoped, tag = 'output window, operand 0, single buffered']
    #allocation3 [shape = 's32[1]{0}', space=sflag, size = 0x4, scoped, tag = 'scoped memory for mmgcn_forward.3']
    %23 = vsyncpa [#allocation3], 0
    // Predicated region
    $region2: #{mmgcn_forward.3} parent=1 // pred_check
      _
    $region3: #{mmgcn_forward.3} parent=1 // pred_check_branch
      %25 = sbr.rel (0) target = $region5
    $region4: #{mmgcn_forward.3} parent=1 // pred_region
      _
    $region5: #{mmgcn_forward.3} parent=1 // pred_fallthru
      _
    // Predicated region
    $region6: #{mmgcn_forward.3} parent=1 // pred_check
      _
    $region7: #{mmgcn_forward.3} parent=1 // pred_check_branch
      %27 = sbr.rel (0) target = $region9
    $region8: #{mmgcn_forward.3} parent=1 // pred_region
      _
    $region9: #{mmgcn_forward.3} parent=1 // pred_fallthru
      _
    // Predicated region
    $region10: #{mmgcn_forward.3} parent=1 // pred_check
      _
    $region11: #{mmgcn_forward.3} parent=1 // pred_check_branch
      %29 = sbr.rel (0) target = $region13
    $region12: #{mmgcn_forward.3} parent=1 // pred_region
      _
    $region13: #{mmgcn_forward.3} parent=1 // pred_fallthru
      _
    // Predicated region
    $region14: #{mmgcn_forward.3} parent=1 // pred_check
      _
    $region15: #{mmgcn_forward.3} parent=1 // pred_check_branch
      %31 = sbr.rel (0) target = $region17
    $region16: #{mmgcn_forward.3} parent=1 // pred_region
      _
    $region17: #{mmgcn_forward.3} parent=1 // pred_fallthru
      _
    // Predicated region
    $region18: #{mmgcn_forward.3} parent=1 // pred_check
      _
    $region19: #{mmgcn_forward.3} parent=1 // pred_check_branch
      %33 = sbr.rel (0) target = $region21
    $region20: #{mmgcn_forward.3} parent=1 // pred_region
      _
    $region21: #{mmgcn_forward.3} parent=1 // pred_fallthru
      _
    // Predicated region
    $region22: #{mmgcn_forward.3} parent=1 // pred_check
      _
    $region23: #{mmgcn_forward.3} parent=1 // pred_check_branch
      %35 = sbr.rel (0) target = $region25
    $region24: #{mmgcn_forward.3} parent=1 // pred_region
      _
    $region25: #{mmgcn_forward.3} parent=1 // pred_fallthru
      _
    // Predicated region
    $region26: #{mmgcn_forward.3} parent=1 // pred_check
      _
    $region27: #{mmgcn_forward.3} parent=1 // pred_check_branch
      %37 = sbr.rel (0) target = $region29
    $region28: #{mmgcn_forward.3} parent=1 // pred_region
      _
    $region29: #{mmgcn_forward.3} parent=1 // pred_fallthru
      _
    // Predicated region
    $region30: #{mmgcn_forward.3} parent=1 // pred_check
      _
    $region31: #{mmgcn_forward.3} parent=1 // pred_check_branch
      %39 = sbr.rel (0) target = $region33
    $region32: #{mmgcn_forward.3} parent=1 // pred_region
      _
    $region33: #{mmgcn_forward.3} parent=1 // pred_fallthru
      _
    // Predicated region
    $region34: #{mmgcn_forward.3} parent=1 // pred_check
      _
    $region35: #{mmgcn_forward.3} parent=1 // pred_check_branch
      %41 = sbr.rel (0) target = $region37
    $region36: #{mmgcn_forward.3} parent=1 // pred_region
      _
    $region37: #{mmgcn_forward.3} parent=1 // pred_fallthru
      _
    // Predicated region
    $region38: #{mmgcn_forward.3} parent=1 // pred_check
      _
    $region39: #{mmgcn_forward.3} parent=1 // pred_check_branch
      %43 = sbr.rel (0) target = $region41
    $region40: #{mmgcn_forward.3} parent=1 // pred_region
      _
    $region41: #{mmgcn_forward.3} parent=1 // pred_fallthru
      _
    // Predicated region
    $region42: #{mmgcn_forward.3} parent=1 // pred_check
      _
    $region43: #{mmgcn_forward.3} parent=1 // pred_check_branch
      %45 = sbr.rel (0) target = $region45
    $region44: #{mmgcn_forward.3} parent=1 // pred_region
      _
    $region45: #{mmgcn_forward.3} parent=1 // pred_fallthru
      _
    // Predicated region
    $region46: #{mmgcn_forward.3} parent=1 // pred_check
      _
    $region47: #{mmgcn_forward.3} parent=1 // pred_check_branch
      %47 = sbr.rel (0) target = $region49
    $region48: #{mmgcn_forward.3} parent=1 // pred_region
      _
    $region49: #{mmgcn_forward.3} parent=1 // pred_fallthru
      _
    // Predicated region
    $region50: #{mmgcn_forward.3} parent=1 // pred_check
      _
    $region51: #{mmgcn_forward.3} parent=1 // pred_check_branch
      %49 = sbr.rel (0) target = $region53
    $region52: #{mmgcn_forward.3} parent=1 // pred_region
      _
    $region53: #{mmgcn_forward.3} parent=1 // pred_fallthru
      _
    // Predicated region
    $region54: #{mmgcn_forward.3} parent=1 // pred_check
      _
    $region55: #{mmgcn_forward.3} parent=1 // pred_check_branch
      %51 = sbr.rel (0) target = $region57
    $region56: #{mmgcn_forward.3} parent=1 // pred_region
      _
    $region57: #{mmgcn_forward.3} parent=1 // pred_fallthru
      _
    // Predicated region
    $region58: #{mmgcn_forward.3} parent=1 // pred_check
      _
    $region59: #{mmgcn_forward.3} parent=1 // pred_check_branch
      %53 = sbr.rel (0) target = $region61
    $region60: #{mmgcn_forward.3} parent=1 // pred_region
      _
    $region61: #{mmgcn_forward.3} parent=1 // pred_fallthru
      _
    // Predicated region
    $region62: #{mmgcn_forward.3} parent=1 // pred_check
      _
    $region63: #{mmgcn_forward.3} parent=1 // pred_check_branch
      %55 = sbr.rel (0) target = $region65
    $region64: #{mmgcn_forward.3} parent=1 // pred_region
      _
    $region65: #{mmgcn_forward.3} parent=1 // pred_fallthru
      _
    // Predicated region
    $region66: #{mmgcn_forward.3} parent=1 // pred_check
      _
    $region67: #{mmgcn_forward.3} parent=1 // pred_check_branch
      %57 = sbr.rel (0) target = $region69
    $region68: #{mmgcn_forward.3} parent=1 // pred_region
      _
    $region69: #{mmgcn_forward.3} parent=1 // pred_fallthru
      _
    // Predicated region
    $region70: #{mmgcn_forward.3} parent=1 // pred_check
      _
    $region71: #{mmgcn_forward.3} parent=1 // pred_check_branch
      %59 = sbr.rel (0) target = $region73
    $region72: #{mmgcn_forward.3} parent=1 // pred_region
      _
    $region73: #{mmgcn_forward.3} parent=1 // pred_fallthru
      _
    %v61 = vld [vmem:[%s1] sm:$0xff]
    %v62 = vld [vmem:[%s1 + $0x8] sm:$0xff]
    %v63 = vld [vmem:[%s1 + $0x10] sm:$0xff]
    %v64 = vld [vmem:[%s2] sm:$0xff]
    %v65 = vld [vmem:[%s2 + $0x8] sm:$0xff]
    %v66 = vld [vmem:[%s2 + $0x10] sm:$0xff]
    %v67 = vld [vmem:[%s3] sm:$0xff]
    %v68 = vld [vmem:[%s3 + $0x8] sm:$0xff]
    %v69 = vld [vmem:[%s3 + $0x10] sm:$0xff]
    %v70 = vpack.c.bf16 %v62, %v61
    %v71 = vpack.c.bf16 %v64, %v63
    %v72 = vpack.c.bf16 %v66, %v65
    %v73 = vpack.c.bf16 %v68, %v67
    %v74 = vpack.c.bf16 %v69, %v69
    %vm75 = vcmask 195584
    %v77 = vsel %vm75, %v70, 0
    %v80 = vsel %vm75, %v71, 0
    %v83 = vsel %vm75, %v72, 0
    %vm85 = vcmask 1043456
    %v87 = vsel %vm85, %v74, 0
    %89 = vmatprep.subr.bf16.mxu0 0
    %90 = vmatpush1.bf16.msra.mxu0 %v73
    %91 = vmatprep.subr.bf16.mxu0 0
    %92 = vmatpush1.bf16.msra.mxu0 %v87
    %93 = vmatprep.subr.bf16.mxu0 0
    %94 = vmatpush1.bf16.msra.mxu0 0
    %95 = vmatprep.subr.bf16.mxu0 0
    %96 = vmatpush1.bf16.msra.mxu0 0
    %97 = vmatprep.subr.bf16.mxu0 0
    %98 = vmatpush1.bf16.msra.mxu0 0
    %99 = vmatprep.subr.bf16.mxu0 0
    %100 = vmatpush1.bf16.msra.mxu0 0
    %101 = vmatprep.subr.bf16.mxu0 0
    %102 = vmatpush1.bf16.msra.mxu0 0
    %103 = vmatprep.subr.bf16.mxu0 0
    %104 = vmatpush1.bf16.msra.mxu0 0
    %105 = vmatprep.subr.bf16.mxu0 0
    %106 = vmatpush1.bf16.msra.mxu0 0
    %107 = vmatprep.subr.bf16.mxu0 0
    %108 = vmatpush1.bf16.msra.mxu0 0
    %109 = vmatprep.subr.bf16.mxu0 0
    %110 = vmatpush1.bf16.msra.mxu0 0
    %111 = vmatprep.subr.bf16.mxu0 0
    %112 = vmatpush1.bf16.msra.mxu0 0
    %113 = vmatprep.subr.bf16.mxu0 0
    %114 = vmatpush1.bf16.msra.mxu0 0
    %115 = vmatprep.subr.bf16.mxu0 0
    %116 = vmatpush1.bf16.msra.mxu0 0
    %117 = vmatprep.subr.bf16.mxu0 0
    %118 = vmatpush1.bf16.msra.mxu0 0
    %119 = vmatprep.subr.bf16.mxu0 0
    %120 = vmatpush1.bf16.msra.mxu0 0
    %121 = vmatprep.mubr.bf16.mxu0 0
    %122 = vmatmul.mubr.bf16.gmra.mrb[0].mxu0 %v77
    %v123 = vpop.f32.mrb[0].mxu0
    %v124 = vadd.f32 0.0, %v123
    %v125 = vpop.f32.mrb[0].mxu0
    %v126 = vpop.f32.mrb[0].mxu0
    %v127 = vadd.f32 0.0, %v126
    %v128 = vpop.f32.mrb[0].mxu0
    %129 = vmatprep.mubr.bf16.mxu0 0
    %130 = vmatmul.mubr.bf16.gmra.mrb[0].mxu0 %v80
    %v131 = vpop.f32.mrb[0].mxu0
    %v132 = vadd.f32 0.0, %v131
    %v133 = vpop.f32.mrb[0].mxu0
    %v134 = vpop.f32.mrb[0].mxu0
    %v135 = vadd.f32 0.0, %v134
    %v136 = vpop.f32.mrb[0].mxu0
    %137 = vmatprep.mubr.bf16.mxu0 0
    %138 = vmatmul.mubr.bf16.gmra.mrb[0].mxu0 %v83
    %v139 = vpop.f32.mrb[0].mxu0
    %v140 = vadd.f32 0.0, %v139
    %v141 = vpop.f32.mrb[0].mxu0
    %v142 = vpop.f32.mrb[0].mxu0
    %v143 = vadd.f32 0.0, %v142
    %v144 = vpop.f32.mrb[0].mxu0
    %145 = vdwg.mxu0
    %v146 = vpack.c.bf16 %v127, %v124
    %v147 = vpack.c.bf16 %v132, %v132
    %v148 = vld [vmem:[%s4] sm:$0xff]
    %v149 = vld [vmem:[%s4 + $0x8] sm:$0xff]
    %v150 = vld [vmem:[%s4 + $0x10] sm:$0xff]
    %v151 = vld [vmem:[%s4 + $0x18] sm:$0xff]
    %v152 = vpack.c.bf16 %v149, %v148
    %v153 = vpack.c.bf16 %v151, %v150
    %v154 = vld [vmem:[%s5] sm:$0x1]
    %v156 = vlaneseq
    %v157 = vshrl.u32 %v156, 7
    %v158 = vsub.s32 0, %v157
    %v159 = vrot.slane %v154, %v158
    %vm161 = vcmask 261120
    %v163 = vsel %vm161, %v146, 0
    %v166 = vsel %vm161, %v147, 0
    %168 = vmatprep.subr.bf16.mxu0 0
    %169 = vmatpush1.bf16.msra.mxu0 %v152
    %170 = vmatprep.subr.bf16.mxu0 0
    %171 = vmatpush1.bf16.msra.mxu0 %v153
    %172 = vmatprep.subr.bf16.mxu0 0
    %173 = vmatpush1.bf16.msra.mxu0 0
    %174 = vmatprep.subr.bf16.mxu0 0
    %175 = vmatpush1.bf16.msra.mxu0 0
    %176 = vmatprep.subr.bf16.mxu0 0
    %177 = vmatpush1.bf16.msra.mxu0 0
    %178 = vmatprep.subr.bf16.mxu0 0
    %179 = vmatpush1.bf16.msra.mxu0 0
    %180 = vmatprep.subr.bf16.mxu0 0
    %181 = vmatpush1.bf16.msra.mxu0 0
    %182 = vmatprep.subr.bf16.mxu0 0
    %183 = vmatpush1.bf16.msra.mxu0 0
    %184 = vmatprep.subr.bf16.mxu0 0
    %185 = vmatpush1.bf16.msra.mxu0 0
    %186 = vmatprep.subr.bf16.mxu0 0
    %187 = vmatpush1.bf16.msra.mxu0 0
    %188 = vmatprep.subr.bf16.mxu0 0
    %189 = vmatpush1.bf16.msra.mxu0 0
    %190 = vmatprep.subr.bf16.mxu0 0
    %191 = vmatpush1.bf16.msra.mxu0 0
    %192 = vmatprep.subr.bf16.mxu0 0
    %193 = vmatpush1.bf16.msra.mxu0 0
    %194 = vmatprep.subr.bf16.mxu0 0
    %195 = vmatpush1.bf16.msra.mxu0 0
    %196 = vmatprep.subr.bf16.mxu0 0
    %197 = vmatpush1.bf16.msra.mxu0 0
    %198 = vmatprep.subr.bf16.mxu0 0
    %199 = vmatpush1.bf16.msra.mxu0 0
    %200 = vmatprep.mubr.bf16.mxu0 0
    %201 = vmatmul.mubr.bf16.gmra.mrb[0].mxu0 %v163
    %v202 = vpop.f32.mrb[0].mxu0
    %v203 = vadd.f32 %v159, %v202
    %v204 = vpop.f32.mrb[0].mxu0
    %v205 = vpop.f32.mrb[0].mxu0
    %v206 = vadd.f32 %v159, %v205
    %v207 = vpop.f32.mrb[0].mxu0
    %208 = vmatprep.mubr.bf16.mxu0 0
    %209 = vmatmul.mubr.bf16.gmra.mrb[0].mxu0 %v166
    %v210 = vpop.f32.mrb[0].mxu0
    %v211 = vadd.f32 %v159, %v210
    %v212 = vpop.f32.mrb[0].mxu0
    %v213 = vpop.f32.mrb[0].mxu0
    %v214 = vpop.f32.mrb[0].mxu0
    %215 = vdwg.mxu0
    %v216 = vmax.f32 %v203, 0.0
    %v217 = vmax.f32 %v206, 0.0
    %v218 = vmax.f32 %v211, 0.0
    %v219 = vpack.c.bf16 %v140, %v135
    %v220 = vpack.c.bf16 %v143, %v143
    %v221 = vld [vmem:[%s8] sm:$0xff]
    %v222 = vld [vmem:[%s8 + $0x8] sm:$0xff]
    %v223 = vld [vmem:[%s8 + $0x10] sm:$0xff]
    %v224 = vld [vmem:[%s8 + $0x18] sm:$0xff]
    %v225 = vpack.c.bf16 %v222, %v221
    %v226 = vpack.c.bf16 %v224, %v223
    %v227 = vld [vmem:[%s9] sm:$0x1]
    %v229 = vlaneseq
    %v230 = vshrl.u32 %v229, 7
    %v231 = vsub.s32 0, %v230
    %v232 = vrot.slane %v227, %v231
    %v235 = vsel %vm161, %v219, 0
    %v238 = vsel %vm161, %v220, 0
    %240 = vmatprep.subr.bf16.mxu0 0
    %241 = vmatpush1.bf16.msra.mxu0 %v225
    %242 = vmatprep.subr.bf16.mxu0 0
    %243 = vmatpush1.bf16.msra.mxu0 %v226
    %244 = vmatprep.subr.bf16.mxu0 0
    %245 = vmatpush1.bf16.msra.mxu0 0
    %246 = vmatprep.subr.bf16.mxu0 0
    %247 = vmatpush1.bf16.msra.mxu0 0
    %248 = vmatprep.subr.bf16.mxu0 0
    %249 = vmatpush1.bf16.msra.mxu0 0
    %250 = vmatprep.subr.bf16.mxu0 0
    %251 = vmatpush1.bf16.msra.mxu0 0
    %252 = vmatprep.subr.bf16.mxu0 0
    %253 = vmatpush1.bf16.msra.mxu0 0
    %254 = vmatprep.subr.bf16.mxu0 0
    %255 = vmatpush1.bf16.msra.mxu0 0
    %256 = vmatprep.subr.bf16.mxu0 0
    %257 = vmatpush1.bf16.msra.mxu0 0
    %258 = vmatprep.subr.bf16.mxu0 0
    %259 = vmatpush1.bf16.msra.mxu0 0
    %260 = vmatprep.subr.bf16.mxu0 0
    %261 = vmatpush1.bf16.msra.mxu0 0
    %262 = vmatprep.subr.bf16.mxu0 0
    %263 = vmatpush1.bf16.msra.mxu0 0
    %264 = vmatprep.subr.bf16.mxu0 0
    %265 = vmatpush1.bf16.msra.mxu0 0
    %266 = vmatprep.subr.bf16.mxu0 0
    %267 = vmatpush1.bf16.msra.mxu0 0
    %268 = vmatprep.subr.bf16.mxu0 0
    %269 = vmatpush1.bf16.msra.mxu0 0
    %270 = vmatprep.subr.bf16.mxu0 0
    %271 = vmatpush1.bf16.msra.mxu0 0
    %272 = vmatprep.mubr.bf16.mxu0 0
    %273 = vmatmul.mubr.bf16.gmra.mrb[0].mxu0 %v235
    %v274 = vpop.f32.mrb[0].mxu0
    %v275 = vadd.f32 %v232, %v274
    %v276 = vpop.f32.mrb[0].mxu0
    %v277 = vpop.f32.mrb[0].mxu0
    %v278 = vadd.f32 %v232, %v277
    %v279 = vpop.f32.mrb[0].mxu0
    %280 = vmatprep.mubr.bf16.mxu0 0
    %281 = vmatmul.mubr.bf16.gmra.mrb[0].mxu0 %v238
    %v282 = vpop.f32.mrb[0].mxu0
    %v283 = vadd.f32 %v232, %v282
    %v284 = vpop.f32.mrb[0].mxu0
    %v285 = vpop.f32.mrb[0].mxu0
    %v286 = vpop.f32.mrb[0].mxu0
    %287 = vdwg.mxu0
    %v288 = vmax.f32 %v275, 0.0
    %v289 = vmax.f32 %v278, 0.0
    %v290 = vmax.f32 %v283, 0.0
    %v291 = vpack.c.bf16 %v63, %v63
    %v292 = vpack.c.bf16 %v65, %v64
    %v293 = vpack.c.bf16 %v66, %v66
    %v294 = vpack.c.bf16 %v217, %v216
    %v295 = vpack.c.bf16 %v218, %v218
    %v297 = vsel %vm75, %v291, 0
    %v300 = vsel %vm85, %v295, 0
    %302 = vmatprep.subr.bf16.mxu0 0
    %303 = vmatpush1.bf16.msra.mxu0 %v294
    %304 = vmatprep.subr.bf16.mxu0 0
    %305 = vmatpush1.bf16.msra.mxu0 %v300
    %306 = vmatprep.subr.bf16.mxu0 0
    %307 = vmatpush1.bf16.msra.mxu0 0
    %308 = vmatprep.subr.bf16.mxu0 0
    %309 = vmatpush1.bf16.msra.mxu0 0
    %310 = vmatprep.subr.bf16.mxu0 0
    %311 = vmatpush1.bf16.msra.mxu0 0
    %312 = vmatprep.subr.bf16.mxu0 0
    %313 = vmatpush1.bf16.msra.mxu0 0
    %314 = vmatprep.subr.bf16.mxu0 0
    %315 = vmatpush1.bf16.msra.mxu0 0
    %316 = vmatprep.subr.bf16.mxu0 0
    %317 = vmatpush1.bf16.msra.mxu0 0
    %318 = vmatprep.subr.bf16.mxu0 0
    %319 = vmatpush1.bf16.msra.mxu0 0
    %320 = vmatprep.subr.bf16.mxu0 0
    %321 = vmatpush1.bf16.msra.mxu0 0
    %322 = vmatprep.subr.bf16.mxu0 0
    %323 = vmatpush1.bf16.msra.mxu0 0
    %324 = vmatprep.subr.bf16.mxu0 0
    %325 = vmatpush1.bf16.msra.mxu0 0
    %326 = vmatprep.subr.bf16.mxu0 0
    %327 = vmatpush1.bf16.msra.mxu0 0
    %328 = vmatprep.subr.bf16.mxu0 0
    %329 = vmatpush1.bf16.msra.mxu0 0
    %330 = vmatprep.subr.bf16.mxu0 0
    %331 = vmatpush1.bf16.msra.mxu0 0
    %332 = vmatprep.subr.bf16.mxu0 0
    %333 = vmatpush1.bf16.msra.mxu0 0
    %334 = vmatprep.mubr.bf16.mxu0 0
    %335 = vmatmul.mubr.bf16.gmra.mrb[0].mxu0 %v77
    %v336 = vpop.f32.mrb[0].mxu0
    %v337 = vadd.f32 0.0, %v336
    %v338 = vpop.f32.mrb[0].mxu0
    %v339 = vpop.f32.mrb[0].mxu0
    %v340 = vadd.f32 0.0, %v339
    %v341 = vpop.f32.mrb[0].mxu0
    %342 = vmatprep.mubr.bf16.mxu0 0
    %343 = vmatmul.mubr.bf16.gmra.mrb[0].mxu0 %v297
    %v344 = vpop.f32.mrb[0].mxu0
    %v345 = vadd.f32 0.0, %v344
    %v346 = vpop.f32.mrb[0].mxu0
    %v347 = vpop.f32.mrb[0].mxu0
    %v348 = vpop.f32.mrb[0].mxu0
    %349 = vdwg.mxu0
    %v350 = vpack.c.bf16 %v340, %v337
    %v351 = vpack.c.bf16 %v345, %v345
    %v352 = vld [vmem:[%s6] sm:$0xff]
    %v353 = vld [vmem:[%s6 + $0x8] sm:$0xff]
    %v354 = vld [vmem:[%s6 + $0x10] sm:$0xff]
    %v355 = vld [vmem:[%s6 + $0x18] sm:$0xff]
    %v356 = vpack.c.bf16 %v353, %v352
    %v357 = vpack.c.bf16 %v355, %v354
    %v358 = vld [vmem:[%s7] sm:$0x1]
    %v360 = vlaneseq
    %v361 = vshrl.u32 %v360, 7
    %v362 = vsub.s32 0, %v361
    %v363 = vrot.slane %v358, %v362
    %v366 = vsel %vm161, %v350, 0
    %v369 = vsel %vm161, %v351, 0
    %371 = vmatprep.subr.bf16.mxu0 0
    %372 = vmatpush1.bf16.msra.mxu0 %v356
    %373 = vmatprep.subr.bf16.mxu0 0
    %374 = vmatpush1.bf16.msra.mxu0 %v357
    %375 = vmatprep.subr.bf16.mxu0 0
    %376 = vmatpush1.bf16.msra.mxu0 0
    %377 = vmatprep.subr.bf16.mxu0 0
    %378 = vmatpush1.bf16.msra.mxu0 0
    %379 = vmatprep.subr.bf16.mxu0 0
    %380 = vmatpush1.bf16.msra.mxu0 0
    %381 = vmatprep.subr.bf16.mxu0 0
    %382 = vmatpush1.bf16.msra.mxu0 0
    %383 = vmatprep.subr.bf16.mxu0 0
    %384 = vmatpush1.bf16.msra.mxu0 0
    %385 = vmatprep.subr.bf16.mxu0 0
    %386 = vmatpush1.bf16.msra.mxu0 0
    %387 = vmatprep.subr.bf16.mxu0 0
    %388 = vmatpush1.bf16.msra.mxu0 0
    %389 = vmatprep.subr.bf16.mxu0 0
    %390 = vmatpush1.bf16.msra.mxu0 0
    %391 = vmatprep.subr.bf16.mxu0 0
    %392 = vmatpush1.bf16.msra.mxu0 0
    %393 = vmatprep.subr.bf16.mxu0 0
    %394 = vmatpush1.bf16.msra.mxu0 0
    %395 = vmatprep.subr.bf16.mxu0 0
    %396 = vmatpush1.bf16.msra.mxu0 0
    %397 = vmatprep.subr.bf16.mxu0 0
    %398 = vmatpush1.bf16.msra.mxu0 0
    %399 = vmatprep.subr.bf16.mxu0 0
    %400 = vmatpush1.bf16.msra.mxu0 0
    %401 = vmatprep.subr.bf16.mxu0 0
    %402 = vmatpush1.bf16.msra.mxu0 0
    %403 = vmatprep.mubr.bf16.mxu0 0
    %404 = vmatmul.mubr.bf16.gmra.mrb[0].mxu0 %v366
    %v405 = vpop.f32.mrb[0].mxu0
    %v406 = vadd.f32 %v363, %v405
    %v407 = vpop.f32.mrb[0].mxu0
    %v408 = vpop.f32.mrb[0].mxu0
    %v409 = vadd.f32 %v363, %v408
    %v410 = vpop.f32.mrb[0].mxu0
    %411 = vmatprep.mubr.bf16.mxu0 0
    %412 = vmatmul.mubr.bf16.gmra.mrb[0].mxu0 %v369
    %v413 = vpop.f32.mrb[0].mxu0
    %v414 = vadd.f32 %v363, %v413
    %v415 = vpop.f32.mrb[0].mxu0
    %v416 = vpop.f32.mrb[0].mxu0
    %v417 = vpop.f32.mrb[0].mxu0
    %418 = vdwg.mxu0
    %v419 = vmax.f32 %v406, 0.0
    %v420 = vmax.f32 %v409, 0.0
    %v421 = vmax.f32 %v414, 0.0
    %v422 = vpack.c.bf16 %v289, %v288
    %v423 = vpack.c.bf16 %v290, %v290
    %v425 = vsel %vm75, %v292, 0
    %v428 = vsel %vm75, %v293, 0
    %v431 = vsel %vm85, %v423, 0
    %433 = vmatprep.subr.bf16.mxu0 0
    %434 = vmatpush1.bf16.msra.mxu0 %v422
    %435 = vmatprep.subr.bf16.mxu0 0
    %436 = vmatpush1.bf16.msra.mxu0 %v431
    %437 = vmatprep.subr.bf16.mxu0 0
    %438 = vmatpush1.bf16.msra.mxu0 0
    %439 = vmatprep.subr.bf16.mxu0 0
    %440 = vmatpush1.bf16.msra.mxu0 0
    %441 = vmatprep.subr.bf16.mxu0 0
    %442 = vmatpush1.bf16.msra.mxu0 0
    %443 = vmatprep.subr.bf16.mxu0 0
    %444 = vmatpush1.bf16.msra.mxu0 0
    %445 = vmatprep.subr.bf16.mxu0 0
    %446 = vmatpush1.bf16.msra.mxu0 0
    %447 = vmatprep.subr.bf16.mxu0 0
    %448 = vmatpush1.bf16.msra.mxu0 0
    %449 = vmatprep.subr.bf16.mxu0 0
    %450 = vmatpush1.bf16.msra.mxu0 0
    %451 = vmatprep.subr.bf16.mxu0 0
    %452 = vmatpush1.bf16.msra.mxu0 0
    %453 = vmatprep.subr.bf16.mxu0 0
    %454 = vmatpush1.bf16.msra.mxu0 0
    %455 = vmatprep.subr.bf16.mxu0 0
    %456 = vmatpush1.bf16.msra.mxu0 0
    %457 = vmatprep.subr.bf16.mxu0 0
    %458 = vmatpush1.bf16.msra.mxu0 0
    %459 = vmatprep.subr.bf16.mxu0 0
    %460 = vmatpush1.bf16.msra.mxu0 0
    %461 = vmatprep.subr.bf16.mxu0 0
    %462 = vmatpush1.bf16.msra.mxu0 0
    %463 = vmatprep.subr.bf16.mxu0 0
    %464 = vmatpush1.bf16.msra.mxu0 0
    %465 = vmatprep.mubr.bf16.mxu0 0
    %466 = vmatmul.mubr.bf16.gmra.mrb[0].mxu0 %v425
    %v467 = vpop.f32.mrb[0].mxu0
    %v468 = vadd.f32 0.0, %v467
    %v469 = vpop.f32.mrb[0].mxu0
    %v470 = vpop.f32.mrb[0].mxu0
    %v471 = vadd.f32 0.0, %v470
    %v472 = vpop.f32.mrb[0].mxu0
    %473 = vmatprep.mubr.bf16.mxu0 0
    %474 = vmatmul.mubr.bf16.gmra.mrb[0].mxu0 %v428
    %v475 = vpop.f32.mrb[0].mxu0
    %v476 = vadd.f32 0.0, %v475
    %v477 = vpop.f32.mrb[0].mxu0
    %v478 = vpop.f32.mrb[0].mxu0
    %v479 = vpop.f32.mrb[0].mxu0
    %480 = vdwg.mxu0
    %v481 = vpack.c.bf16 %v471, %v468
    %v482 = vpack.c.bf16 %v476, %v476
    %v483 = vld [vmem:[%s10] sm:$0xff]
    %v484 = vld [vmem:[%s10 + $0x8] sm:$0xff]
    %v485 = vld [vmem:[%s10 + $0x10] sm:$0xff]
    %v486 = vld [vmem:[%s10 + $0x18] sm:$0xff]
    %v487 = vpack.c.bf16 %v484, %v483
    %v488 = vpack.c.bf16 %v486, %v485
    %v489 = vld [vmem:[%s11] sm:$0x1]
    %v491 = vlaneseq
    %v492 = vshrl.u32 %v491, 7
    %v493 = vsub.s32 0, %v492
    %v494 = vrot.slane %v489, %v493
    %v497 = vsel %vm161, %v481, 0
    %v500 = vsel %vm161, %v482, 0
    %502 = vmatprep.subr.bf16.mxu0 0
    %503 = vmatpush1.bf16.msra.mxu0 %v487
    %504 = vmatprep.subr.bf16.mxu0 0
    %505 = vmatpush1.bf16.msra.mxu0 %v488
    %506 = vmatprep.subr.bf16.mxu0 0
    %507 = vmatpush1.bf16.msra.mxu0 0
    %508 = vmatprep.subr.bf16.mxu0 0
    %509 = vmatpush1.bf16.msra.mxu0 0
    %510 = vmatprep.subr.bf16.mxu0 0
    %511 = vmatpush1.bf16.msra.mxu0 0
    %512 = vmatprep.subr.bf16.mxu0 0
    %513 = vmatpush1.bf16.msra.mxu0 0
    %514 = vmatprep.subr.bf16.mxu0 0
    %515 = vmatpush1.bf16.msra.mxu0 0
    %516 = vmatprep.subr.bf16.mxu0 0
    %517 = vmatpush1.bf16.msra.mxu0 0
    %518 = vmatprep.subr.bf16.mxu0 0
    %519 = vmatpush1.bf16.msra.mxu0 0
    %520 = vmatprep.subr.bf16.mxu0 0
    %521 = vmatpush1.bf16.msra.mxu0 0
    %522 = vmatprep.subr.bf16.mxu0 0
    %523 = vmatpush1.bf16.msra.mxu0 0
    %524 = vmatprep.subr.bf16.mxu0 0
    %525 = vmatpush1.bf16.msra.mxu0 0
    %526 = vmatprep.subr.bf16.mxu0 0
    %527 = vmatpush1.bf16.msra.mxu0 0
    %528 = vmatprep.subr.bf16.mxu0 0
    %529 = vmatpush1.bf16.msra.mxu0 0
    %530 = vmatprep.subr.bf16.mxu0 0
    %531 = vmatpush1.bf16.msra.mxu0 0
    %532 = vmatprep.subr.bf16.mxu0 0
    %533 = vmatpush1.bf16.msra.mxu0 0
    %534 = vmatprep.mubr.bf16.mxu0 0
    %535 = vmatmul.mubr.bf16.gmra.mrb[0].mxu0 %v497
    %v536 = vpop.f32.mrb[0].mxu0
    %v537 = vadd.f32 %v494, %v536
    %v538 = vpop.f32.mrb[0].mxu0
    %v539 = vpop.f32.mrb[0].mxu0
    %v540 = vadd.f32 %v494, %v539
    %v541 = vpop.f32.mrb[0].mxu0
    %542 = vmatprep.mubr.bf16.mxu0 0
    %543 = vmatmul.mubr.bf16.gmra.mrb[0].mxu0 %v500
    %v544 = vpop.f32.mrb[0].mxu0
    %v545 = vadd.f32 %v494, %v544
    %v546 = vpop.f32.mrb[0].mxu0
    %v547 = vpop.f32.mrb[0].mxu0
    %v548 = vpop.f32.mrb[0].mxu0
    %549 = vdwg.mxu0
    %v550 = vmax.f32 %v537, 0.0
    %v551 = vmax.f32 %v540, 0.0
    %v552 = vmax.f32 %v545, 0.0
    %v553 = vsel %vm161, %v216, 0.0
    %554 = vadd.xlane.f32.xlu0 %v553
    %v555 = vpop.xlane.xlu0 %554
    %v556 = vsel %vm161, %v217, 0.0
    %557 = vadd.xlane.f32.xlu0 %v556
    %v558 = vpop.xlane.xlu0 %557
    %v559 = vsel %vm161, %v218, 0.0
    %560 = vadd.xlane.f32.xlu0 %v559
    %v561 = vpop.xlane.xlu0 %560
    %v562 = vadd.f32 %v555, %v558
    %v563 = vadd.f32 %v562, %v561
    %v564 = vrot.slane %v563, 4
    %v565 = vadd.f32 %v563, %v564
    %v566 = vrot.slane %v565, 2
    %v567 = vadd.f32 %v565, %v566
    %v568 = vrot.slane %v567, 1
    %v569 = vadd.f32 %v567, %v568
    %v570 = vmul.f32 %v569, 0.0013020834
    %v571 = vsel %vm161, %v419, 0.0
    %572 = vadd.xlane.f32.xlu0 %v571
    %v573 = vpop.xlane.xlu0 %572
    %v574 = vsel %vm161, %v420, 0.0
    %575 = vadd.xlane.f32.xlu0 %v574
    %v576 = vpop.xlane.xlu0 %575
    %v577 = vsel %vm161, %v421, 0.0
    %578 = vadd.xlane.f32.xlu0 %v577
    %v579 = vpop.xlane.xlu0 %578
    %v580 = vadd.f32 %v573, %v576
    %v581 = vadd.f32 %v580, %v579
    %v582 = vrot.slane %v581, 4
    %v583 = vadd.f32 %v581, %v582
    %v584 = vrot.slane %v583, 2
    %v585 = vadd.f32 %v583, %v584
    %v586 = vrot.slane %v585, 1
    %v587 = vadd.f32 %v585, %v586
    %v588 = vmul.f32 %v587, 0.0013020834
    %v589 = vsel %vm161, %v288, 0.0
    %590 = vadd.xlane.f32.xlu0 %v589
    %v591 = vpop.xlane.xlu0 %590
    %v592 = vsel %vm161, %v289, 0.0
    %593 = vadd.xlane.f32.xlu0 %v592
    %v594 = vpop.xlane.xlu0 %593
    %v595 = vsel %vm161, %v290, 0.0
    %596 = vadd.xlane.f32.xlu0 %v595
    %v597 = vpop.xlane.xlu0 %596
    %v598 = vadd.f32 %v591, %v594
    %v599 = vadd.f32 %v598, %v597
    %v600 = vrot.slane %v599, 4
    %v601 = vadd.f32 %v599, %v600
    %v602 = vrot.slane %v601, 2
    %v603 = vadd.f32 %v601, %v602
    %v604 = vrot.slane %v603, 1
    %v605 = vadd.f32 %v603, %v604
    %v606 = vmul.f32 %v605, 0.0013020834
    %v607 = vsel %vm161, %v550, 0.0
    %608 = vadd.xlane.f32.xlu0 %v607
    %v609 = vpop.xlane.xlu0 %608
    %v610 = vsel %vm161, %v551, 0.0
    %611 = vadd.xlane.f32.xlu0 %v610
    %v612 = vpop.xlane.xlu0 %611
    %v613 = vsel %vm161, %v552, 0.0
    %614 = vadd.xlane.f32.xlu0 %v613
    %v615 = vpop.xlane.xlu0 %614
    %v616 = vadd.f32 %v609, %v612
    %v617 = vadd.f32 %v616, %v615
    %v618 = vrot.slane %v617, 4
    %v619 = vadd.f32 %v617, %v618
    %v620 = vrot.slane %v619, 2
    %v621 = vadd.f32 %v619, %v620
    %v622 = vrot.slane %v621, 1
    %v623 = vadd.f32 %v621, %v622
    %v624 = vmul.f32 %v623, 0.0013020834
    %v625 = vld [vmem:[%s12] sm:$0xf]
    %v626 = vld [vmem:[%s13] sm:$0x1]
    %v627 = vmul.f32 %v570, %v625
    %v628 = vadd.f32 %v626, %v627
    %v629 = vmul.f32 %v588, %v625
    %v632 = vunpack.c.l.s4 1966171168
    %v633 = vunpack.c.0.s8 %v632
    %v634 = vlaneseq
    %v635 = vshrl.u32 %v634, 7
    %v636 = vsub.s32 %v633, %v635
    %v637 = vrot.slane %v629, %v636
    %v638 = vcombine.high %v637, %v637
    %v640 = vunpack.c.l.s4 1966171168
    %v641 = vunpack.c.0.s8 %v640
    %v642 = vlaneseq
    %v643 = vshrl.u32 %v642, 7
    %v644 = vsub.s32 %v641, %v643
    %v645 = vrot.slane %v638, %v644
    %v647 = vadd.f32 %v628, %v645
    %v648 = vmul.f32 %v606, %v625
    %v651 = vunpack.c.l.s4 1966171168
    %v652 = vunpack.c.0.s8 %v651
    %v653 = vlaneseq
    %v654 = vshrl.u32 %v653, 7
    %v655 = vsub.s32 %v652, %v654
    %v656 = vrot.slane %v648, %v655
    %v658 = vunpack.c.l.s4 1966171168
    %v659 = vunpack.c.0.s8 %v658
    %v660 = vlaneseq
    %v661 = vshrl.u32 %v660, 7
    %v662 = vsub.s32 %v659, %v661
    %v663 = vrot.slane %v656, %v662
    %v664 = vcombine.high %v663, %v663
    %v666 = vadd.f32 %v647, %v664
    %v667 = vmul.f32 %v624, %v625
    %v670 = vunpack.c.l.s4 1966171168
    %v671 = vunpack.c.0.s8 %v670
    %v672 = vlaneseq
    %v673 = vshrl.u32 %v672, 7
    %v674 = vsub.s32 %v671, %v673
    %v675 = vrot.slane %v667, %v674
    %v676 = vcombine.high %v675, %v675
    %v678 = vunpack.c.l.s4 1966171168
    %v679 = vunpack.c.0.s8 %v678
    %v680 = vlaneseq
    %v681 = vshrl.u32 %v680, 7
    %v682 = vsub.s32 %v679, %v681
    %v683 = vrot.slane %v676, %v682
    %v684 = vcombine.high %v683, %v683
    %v686 = vadd.f32 %v666, %v684
    %v687 = vmax.f32 %v686, 0.0
    %v688 = vld [vmem:[%s14] sm:$0xf]
    %v689 = vld [vmem:[%s15] sm:$0x1]
    %v690 = vmul.f32 %v687, %v688
    %vm691 = vcmask 155648
    %v692 = vsel %vm691, %v690, 0.0
    %693 = vadd.xlane.f32.xlu0 %v692
    %v694 = vpop.xlane.xlu0 %693
    %v695 = vadd.f32 %v694, %v689
    %v696 = vxor.u32 %v695, 2147483648
    %v697 = vmul.f32 %v696, 1.442695
    %v698 = vpow.pop %v697
    %v699 = vadd.f32 %v698, 1.0
    %v700 = vrcp.pop %v699
    %v701 = vmul.f32 1.0, %v700
    %s703 = vtos %v701
    %v704 = vstv %s703
    %v706 = vmul.f32 %v704, %v216
    %v707 = vmul.f32 %v704, %v217
    %v708 = vmul.f32 %v704, %v218
    %v709 = vmax.f32 %v706, 0.0
    %v710 = vmax.f32 %v707, 0.0
    %v711 = vmax.f32 %v708, 0.0
    %v714 = vunpack.c.l.s4 1966171168
    %v715 = vunpack.c.0.s8 %v714
    %v716 = vlaneseq
    %v717 = vshrl.u32 %v716, 7
    %v718 = vsub.s32 %v715, %v717
    %v719 = vrot.slane %v688, %v718
    %v720 = vcombine.high %v719, %v719
    %v722 = vunpack.c.l.s4 1966171168
    %v723 = vunpack.c.0.s8 %v722
    %v724 = vlaneseq
    %v725 = vshrl.u32 %v724, 7
    %v726 = vsub.s32 %v723, %v725
    %v727 = vrot.slane %v719, %v726
    %v729 = vunpack.c.l.s4 1966171168
    %v730 = vunpack.c.0.s8 %v729
    %v731 = vlaneseq
    %v732 = vshrl.u32 %v731, 7
    %v733 = vsub.s32 %v730, %v732
    %v734 = vrot.slane %v720, %v733
    %v736 = vmul.f32 %v687, %v734
    %v737 = vsel %vm691, %v736, 0.0
    %738 = vadd.xlane.f32.xlu0 %v737
    %v739 = vpop.xlane.xlu0 %738
    %v741 = vlaneseq
    %v742 = vshrl.u32 %v741, 7
    %v743 = vsub.s32 0, %v742
    %v744 = vrot.slane %v689, %v743
    %745 = vrot.lane.b32.xlu0 %v744, 127
    %v746 = vpop.permute.xlu0 %745
    %v748 = vadd.f32 %v739, %v746
    %v749 = vxor.u32 %v748, 2147483648
    %v750 = vmul.f32 %v749, 1.442695
    %v751 = vpow.pop %v750
    %v752 = vadd.f32 %v751, 1.0
    %v753 = vrcp.pop %v752
    %v754 = vmul.f32 1.0, %v753
    %s756 = vtos %v754
    %v757 = vstv %s756
    %v759 = vmul.f32 %v757, %v419
    %v760 = vmul.f32 %v757, %v420
    %v761 = vmul.f32 %v757, %v421
    %v762 = vmax.f32 %v759, 0.0
    %v763 = vmax.f32 %v760, 0.0
    %v764 = vmax.f32 %v761, 0.0
    %v765 = vcombine.high %v727, %v727
    %v767 = vmul.f32 %v687, %v765
    %v768 = vsel %vm691, %v767, 0.0
    %769 = vadd.xlane.f32.xlu0 %v768
    %v770 = vpop.xlane.xlu0 %769
    %771 = vrot.lane.b32.xlu0 %v744, 126
    %v772 = vpop.permute.xlu0 %771
    %v774 = vadd.f32 %v770, %v772
    %v775 = vxor.u32 %v774, 2147483648
    %v776 = vmul.f32 %v775, 1.442695
    %v777 = vpow.pop %v776
    %v778 = vadd.f32 %v777, 1.0
    %v779 = vrcp.pop %v778
    %v780 = vmul.f32 1.0, %v779
    %s782 = vtos %v780
    %v783 = vstv %s782
    %v785 = vmul.f32 %v783, %v288
    %v786 = vmul.f32 %v783, %v289
    %v787 = vmul.f32 %v783, %v290
    %v788 = vmax.f32 %v785, 0.0
    %v789 = vmax.f32 %v786, 0.0
    %v790 = vmax.f32 %v787, 0.0
    %v791 = vcombine.high %v734, %v734
    %v793 = vmul.f32 %v687, %v791
    %v794 = vsel %vm691, %v793, 0.0
    %795 = vadd.xlane.f32.xlu0 %v794
    %v796 = vpop.xlane.xlu0 %795
    %797 = vrot.lane.b32.xlu0 %v744, 125
    %v798 = vpop.permute.xlu0 %797
    %v800 = vadd.f32 %v796, %v798
    %v801 = vxor.u32 %v800, 2147483648
    %v802 = vmul.f32 %v801, 1.442695
    %v803 = vpow.pop %v802
    %v804 = vadd.f32 %v803, 1.0
    %v805 = vrcp.pop %v804
    %v806 = vmul.f32 1.0, %v805
    %s808 = vtos %v806
    %v809 = vstv %s808
    %v811 = vmul.f32 %v809, %v550
    %v812 = vmul.f32 %v809, %v551
    %v813 = vmul.f32 %v809, %v552
    %v814 = vmax.f32 %v811, 0.0
    %v815 = vmax.f32 %v812, 0.0
    %v816 = vmax.f32 %v813, 0.0
    %820 = vrot.lane.b32.xlu0 %v762, 32
    %v821 = vpop.permute.xlu0 %820
    %822 = vrot.lane.b32.xlu0 %v763, 32
    %v823 = vpop.permute.xlu0 %822
    %824 = vrot.lane.b32.xlu0 %v764, 32
    %v825 = vpop.permute.xlu0 %824
    %832 = vrot.lane.b32.xlu0 %v788, 64
    %v833 = vpop.permute.xlu0 %832
    %834 = vrot.lane.b32.xlu0 %v789, 64
    %v835 = vpop.permute.xlu0 %834
    %836 = vrot.lane.b32.xlu0 %v790, 64
    %v837 = vpop.permute.xlu0 %836
    %844 = vrot.lane.b32.xlu0 %v814, 96
    %v845 = vpop.permute.xlu0 %844
    %846 = vrot.lane.b32.xlu0 %v815, 96
    %v847 = vpop.permute.xlu0 %846
    %848 = vrot.lane.b32.xlu0 %v816, 96
    %v849 = vpop.permute.xlu0 %848
    %v853 = vsel %vm161, %v709, %v821
    %v854 = vsel %vm161, %v710, %v823
    %v855 = vsel %vm161, %v711, %v825
    %vm856 = vcmask 523264
    %v857 = vsel %vm856, %v853, %v833
    %v858 = vsel %vm856, %v854, %v835
    %v859 = vsel %vm856, %v855, %v837
    %vm860 = vcmask 785408
    %v861 = vsel %vm860, %v857, %v845
    %v862 = vsel %vm860, %v858, %v847
    %v863 = vsel %vm860, %v859, %v849
    %v864 = vpack.c.bf16 %v862, %v861
    %v865 = vpack.c.bf16 %v863, %v863
    %v866 = vld [vmem:[%s16] sm:$0xff]
    %v867 = vld [vmem:[%s16 + $0x8] sm:$0xff]
    %v868 = vld [vmem:[%s16 + $0x10] sm:$0xff]
    %v869 = vld [vmem:[%s16 + $0x18] sm:$0xff]
    %v870 = vld [vmem:[%s16 + $0x20] sm:$0xff]
    %v871 = vld [vmem:[%s16 + $0x28] sm:$0xff]
    %v872 = vld [vmem:[%s16 + $0x30] sm:$0xff]
    %v873 = vld [vmem:[%s16 + $0x38] sm:$0xff]
    %v874 = vld [vmem:[%s16 + $0x40] sm:$0xff]
    %v875 = vld [vmem:[%s16 + $0x48] sm:$0xff]
    %v876 = vld [vmem:[%s16 + $0x50] sm:$0xff]
    %v877 = vld [vmem:[%s16 + $0x58] sm:$0xff]
    %v878 = vld [vmem:[%s16 + $0x60] sm:$0xff]
    %v879 = vld [vmem:[%s16 + $0x68] sm:$0xff]
    %v880 = vld [vmem:[%s16 + $0x70] sm:$0xff]
    %v881 = vld [vmem:[%s16 + $0x78] sm:$0xff]
    %v882 = vpack.c.bf16 %v867, %v866
    %v883 = vpack.c.bf16 %v869, %v868
    %v884 = vpack.c.bf16 %v871, %v870
    %v885 = vpack.c.bf16 %v873, %v872
    %v886 = vpack.c.bf16 %v875, %v874
    %v887 = vpack.c.bf16 %v877, %v876
    %v888 = vpack.c.bf16 %v879, %v878
    %v889 = vpack.c.bf16 %v881, %v880
    %v890 = vld [vmem:[%s17] sm:$0x1]
    %v892 = vlaneseq
    %v893 = vshrl.u32 %v892, 7
    %v894 = vsub.s32 0, %v893
    %v895 = vrot.slane %v890, %v894
    %897 = vmatprep.subr.bf16.mxu0 0
    %898 = vmatpush1.bf16.msra.mxu0 %v882
    %899 = vmatprep.subr.bf16.mxu0 0
    %900 = vmatpush1.bf16.msra.mxu0 %v883
    %901 = vmatprep.subr.bf16.mxu0 0
    %902 = vmatpush1.bf16.msra.mxu0 %v884
    %903 = vmatprep.subr.bf16.mxu0 0
    %904 = vmatpush1.bf16.msra.mxu0 %v885
    %905 = vmatprep.subr.bf16.mxu0 0
    %906 = vmatpush1.bf16.msra.mxu0 %v886
    %907 = vmatprep.subr.bf16.mxu0 0
    %908 = vmatpush1.bf16.msra.mxu0 %v887
    %909 = vmatprep.subr.bf16.mxu0 0
    %910 = vmatpush1.bf16.msra.mxu0 %v888
    %911 = vmatprep.subr.bf16.mxu0 0
    %912 = vmatpush1.bf16.msra.mxu0 %v889
    %913 = vmatprep.subr.bf16.mxu0 0
    %914 = vmatpush1.bf16.msra.mxu0 0
    %915 = vmatprep.subr.bf16.mxu0 0
    %916 = vmatpush1.bf16.msra.mxu0 0
    %917 = vmatprep.subr.bf16.mxu0 0
    %918 = vmatpush1.bf16.msra.mxu0 0
    %919 = vmatprep.subr.bf16.mxu0 0
    %920 = vmatpush1.bf16.msra.mxu0 0
    %921 = vmatprep.subr.bf16.mxu0 0
    %922 = vmatpush1.bf16.msra.mxu0 0
    %923 = vmatprep.subr.bf16.mxu0 0
    %924 = vmatpush1.bf16.msra.mxu0 0
    %925 = vmatprep.subr.bf16.mxu0 0
    %926 = vmatpush1.bf16.msra.mxu0 0
    %927 = vmatprep.subr.bf16.mxu0 0
    %928 = vmatpush1.bf16.msra.mxu0 0
    %929 = vmatprep.mubr.bf16.mxu0 0
    %930 = vmatmul.mubr.bf16.gmra.mrb[0].mxu0 %v864
    %v931 = vpop.f32.mrb[0].mxu0
    %v932 = vadd.f32 %v895, %v931
    %v933 = vpop.f32.mrb[0].mxu0
    %v934 = vpop.f32.mrb[0].mxu0
    %v935 = vadd.f32 %v895, %v934
    %v936 = vpop.f32.mrb[0].mxu0
    %937 = vmatprep.mubr.bf16.mxu0 0
    %938 = vmatmul.mubr.bf16.gmra.mrb[0].mxu0 %v865
    %v939 = vpop.f32.mrb[0].mxu0
    %v940 = vadd.f32 %v895, %v939
    %v941 = vpop.f32.mrb[0].mxu0
    %v942 = vpop.f32.mrb[0].mxu0
    %v943 = vpop.f32.mrb[0].mxu0
    %944 = vdwg.mxu0
    %v945 = vld [vmem:[%s0] sm:$0xff]
    %v946 = vld [vmem:[%s0 + $0x8] sm:$0xff]
    %vm947 = vcmask 64512
    %v949 = vsel %vm947, %v945, 0
    %v952 = vsel %vm947, %v946, 0
    %v955 = vsel %vm947, %v932, 0
    %v958 = vsel %vm947, %v935, 0
    %v961 = vsel %vm947, %v940, 0
    %963 = vmatprep.subr.mxu0 0.0
    %964 = vmatpush1.xpose.msra.mxu0 %v955
    %965 = vmatprep.subr.mxu0 0.0
    %966 = vmatpush1.xpose.msra.mxu0 %v958
    %967 = vmatprep.subr.mxu0 0.0
    %968 = vmatpush1.xpose.msra.mxu0 %v961
    %969 = vmatprep.subr.mxu0 0.0
    %970 = vmatpush1.xpose.msra.mxu0 0.0
    %971 = vmatprep.subr.mxu0 0.0
    %972 = vmatpush1.xpose.msra.mxu0 0.0
    %973 = vmatprep.subr.mxu0 0.0
    %974 = vmatpush1.xpose.msra.mxu0 0.0
    %975 = vmatprep.subr.mxu0 0.0
    %976 = vmatpush1.xpose.msra.mxu0 0.0
    %977 = vmatprep.subr.mxu0 0.0
    %978 = vmatpush1.xpose.msra.mxu0 0.0
    %979 = vmatprep.subr.mxu0 0.0
    %980 = vmatpush1.xpose.msra.mxu0 0.0
    %981 = vmatprep.subr.mxu0 0.0
    %982 = vmatpush1.xpose.msra.mxu0 0.0
    %983 = vmatprep.subr.mxu0 0.0
    %984 = vmatpush1.xpose.msra.mxu0 0.0
    %985 = vmatprep.subr.mxu0 0.0
    %986 = vmatpush1.xpose.msra.mxu0 0.0
    %987 = vmatprep.subr.mxu0 0.0
    %988 = vmatpush1.xpose.msra.mxu0 0.0
    %989 = vmatprep.subr.mxu0 0.0
    %990 = vmatpush1.xpose.msra.mxu0 0.0
    %991 = vmatprep.subr.mxu0 0.0
    %992 = vmatpush1.xpose.msra.mxu0 0.0
    %993 = vmatprep.subr.mxu0 0.0
    %994 = vmatpush1.xpose.msra.mxu0 0.0
    %995 = vmatprep.subr.mxu0 0.0
    %996 = vmatpush1.xpose.msra.mxu0 0.0
    %997 = vmatprep.subr.mxu0 0.0
    %998 = vmatpush1.xpose.msra.mxu0 0.0
    %999 = vmatprep.subr.mxu0 0.0
    %1000 = vmatpush1.xpose.msra.mxu0 0.0
    %1001 = vmatprep.subr.mxu0 0.0
    %1002 = vmatpush1.xpose.msra.mxu0 0.0
    %1003 = vmatprep.subr.mxu0 0.0
    %1004 = vmatpush1.xpose.msra.mxu0 0.0
    %1005 = vmatprep.subr.mxu0 0.0
    %1006 = vmatpush1.xpose.msra.mxu0 0.0
    %1007 = vmatprep.subr.mxu0 0.0
    %1008 = vmatpush1.xpose.msra.mxu0 0.0
    %1009 = vmatprep.subr.mxu0 0.0
    %1010 = vmatpush1.xpose.msra.mxu0 0.0
    %1011 = vmatprep.subr.mxu0 0.0
    %1012 = vmatpush1.xpose.msra.mxu0 0.0
    %1013 = vmatprep.subr.mxu0 0.0
    %1014 = vmatpush1.xpose.msra.mxu0 0.0
    %1015 = vmatprep.subr.mxu0 0.0
    %1016 = vmatpush1.xpose.msra.mxu0 0.0
    %1017 = vmatprep.subr.mxu0 0.0
    %1018 = vmatpush1.xpose.msra.mxu0 0.0
    %1019 = vmatprep.subr.mxu0 0.0
    %1020 = vmatpush1.xpose.msra.mxu0 0.0
    %1021 = vmatprep.subr.mxu0 0.0
    %1022 = vmatpush1.xpose.msra.mxu0 0.0
    %1023 = vmatprep.subr.mxu0 0.0
    %1024 = vmatpush1.xpose.msra.mxu0 0.0
    %1025 = vmatprep.subr.mxu0 0.0
    %1026 = vmatpush1.xpose.msra.mxu0 0.0
    %1027 = vmatprep.mubr.f32.mxu0 0.0
    %1028 = vmatmul.mubr.f32.gmra.mrb[0].mxu0 %v949
    %v1029 = vpop.f32.mrb[0].mxu0
    %v1030 = vadd.f32 0.0, %v1029
    %v1031 = vpop.f32.mrb[0].mxu0
    %1032 = vmatprep.mubr.f32.mxu0 0.0
    %1033 = vmatmul.mubr.f32.gmra.mrb[0].mxu0 %v952
    %v1034 = vpop.f32.mrb[0].mxu0
    %v1035 = vadd.f32 0.0, %v1034
    %v1036 = vpop.f32.mrb[0].mxu0
    %1037 = vdwg.mxu0
    %1038 = vst.msk [vmem:[#allocation2] sm:$0xff] %vm75, %v1030
    %1039 = vst.msk [vmem:[#allocation2 + $0x8] sm:$0xff] %vm75, %v1035
    // Predicated region
    $region74: #{mmgcn_forward.3} parent=1 // pred_check
      _
    $region75: #{mmgcn_forward.3} parent=1 // pred_check_branch
      %1041 = sbr.rel (0) target = $region77
    $region76: #{mmgcn_forward.3} parent=1 // pred_region
      %s1043 = ssub.s32 256, 256
      %1044 = vsyncadd [#allocation3], %s1043
      %s1045 = sshll.u32 [#allocation2], 4
      %s1046 = int_to_ptr.vmem [resolvable:$true] %s1045
      %1051 = dma.vmem_to_hbm [thread:$0]  %s1046, 256, %s18, [#allocation3], 128, 128, 8
    $region77: #{mmgcn_forward.3} parent=1 // pred_fallthru
      _
    // Predicated region
    $region78: #{mmgcn_forward.3} parent=1 // pred_check
      _
    $region79: #{mmgcn_forward.3} parent=1 // pred_check_branch
      %1053 = sbr.rel (0) target = $region81
    $region80: #{mmgcn_forward.3} parent=1 // pred_region
      %1054 = dma.done [#allocation3], 256
    $region81: #{mmgcn_forward.3} parent=1 // pred_fallthru
      _
    %1055 = vsyncpa [#allocation3], 1

</llo_original>
